<compile_context>
chip_gen: v7x
topology: tpu7x:2x2x1
jax: 0.10.0
libtpu: 0.0.40
codegen_flags: <defaults>
</compile_context>

<pallas_src>
import jax
import jax.numpy as jnp
from jax.experimental import pallas as pl
from jax.experimental.pallas import tpu as pltpu


def _get_hidden_dim(n_embd: int) -> int:
    return 256 * ((int(2 * 4 * n_embd / 3) + 256 - 1) // 256)


def _round_up(x: int, m: int) -> int:
    return ((x + m - 1) // m) * m


# ---------------------------------------------------------------------------
# Kernel
# ---------------------------------------------------------------------------
def swiglu_kernel(x_ref, wv_ref, bwv_ref, w2_ref, b2_ref, o_ref):
    # x_ref:   (tm, Dp)    bf16  token tile (resident across the H axis)
    # wv_ref:  (Dp, 2*th)  bf16  fused [W tile | V tile] for this H step
    # bwv_ref: (1, 2*th)   f32   fused [b_W tile | b_V tile]
    # w2_ref:  (th, Dp)    bf16  W_2 tile for this H step
    # b2_ref:  (1, Dp)     f32   output bias
    # o_ref:   (tm, Dp)    f32   output tile, doubles as the reduction accumulator
    j = pl.program_id(1)
    th = w2_ref.shape[0]

    @pl.when(j == 0)
    def _init():
        # Initialize the resident output tile with the output bias -> no finalize pass.
        o_ref[...] = jnp.broadcast_to(b2_ref[...], o_ref.shape)

    # One wide MXU pass computes both gate projections (bf16 in, f32 accumulate).
    hwv = jnp.dot(x_ref[...], wv_ref[...], preferred_element_type=jnp.float32)
    hwv = hwv + bwv_ref[...]
    h_w = hwv[:, :th]
    h_v = hwv[:, th:]

    # SiLU gating in f32 (VPU + EUP).
    gated = (h_w * jax.nn.sigmoid(h_w)) * h_v

    # Second projection: accumulate into the resident f32 output tile.
    o_ref[...] += jnp.dot(
        gated.astype(jnp.bfloat16), w2_ref[...], preferred_element_type=jnp.float32
    )


# ---------------------------------------------------------------------------
# One-time parameter preparation (hoisted out of the forward path)
# ---------------------------------------------------------------------------
def prepare_swiglu_params(W, bW, V, bV, W2, b2, *, th=256, param_dtype=jnp.bfloat16):
    """Pad D to a multiple of 128, fuse W/V (and biases) per H-tile, cast to bf16.

    Do this ONCE per parameter set; the result is reused by every forward call.
    W, V: (D, H); bW, bV: (1, H); W2: (H, D); b2: (1, D).
    """
    D, H = W.shape
    assert V.shape == (D, H) and W2.shape == (H, D)
    assert bW.shape == (1, H) and bV.shape == (1, H) and b2.shape == (1, D)

    th = min(th, H)
    while H % th != 0:
        th //= 2
    nh = H // th

    Dp = _round_up(D, 128)
    if Dp != D:
        W = jnp.pad(W, ((0, Dp - D), (0, 0)))
        V = jnp.pad(V, ((0, Dp - D), (0, 0)))
        W2 = jnp.pad(W2, ((0, 0), (0, Dp - D)))
        b2 = jnp.pad(b2, ((0, 0), (0, Dp - D)))

    # Tile j of WV (width 2*th) = [W tile j | V tile j]; likewise for the biases.
    WV = jnp.concatenate(
        [W.reshape(Dp, nh, th), V.reshape(Dp, nh, th)], axis=2
    ).reshape(Dp, 2 * H)
    bWV = jnp.concatenate(
        [bW.reshape(1, nh, th), bV.reshape(1, nh, th)], axis=2
    ).reshape(1, 2 * H)

    return {
        "WV": WV.astype(param_dtype),
        "bWV": bWV.astype(jnp.float32),
        "W2": W2.astype(param_dtype),
        "b2": b2.astype(jnp.float32),
        "D": D,
        "H": H,
        "Dp": Dp,
        "th": th,
    }


# ---------------------------------------------------------------------------
# Per-chip tiling / VMEM budget
# ---------------------------------------------------------------------------
def _chip_generation() -> str:
    try:
        kind = jax.devices()[0].device_kind.lower()
    except Exception:
        return "unknown"
    if "v7" in kind:
        return "v7x"
    if "v6" in kind or "trillium" in kind:
        return "v6e"
    if "v5 lite" in kind or "v5lite" in kind or "v5e" in kind:
        return "v5e"
    return "unknown"


def _default_config(gen: str):
    """(tm_target, th_target, vmem_cap_bytes) per chip generation."""
    if gen == "v6e":
        # 128 MiB physical VMEM; needs ~640 FLOPs/B to be MXU-bound -> big token tile.
        return 1024, 512, 100 << 20
    if gen == "v7x":
        # 64 MiB physical per TC; ~310 FLOPs/B already compute-bound at tm~512.
        return 512, 256, 56 << 20
    if gen == "v5e":
        # Near the compute/BW balance point at tm=256; the win is fitting, not size.
        return 256, 256, 60 << 20
    return 256, 256, 48 << 20


def _tile_vmem_bytes(tm: int, th: int, Dp: int) -> int:
    x_t = tm * Dp * 2            # bf16 token tile
    wv_t = Dp * (2 * th) * 2     # bf16 fused [W|V] tile
    bwv_t = (2 * th) * 4         # f32 fused bias tile
    w2_t = th * Dp * 2           # bf16 W2 tile
    b2_t = Dp * 4                # f32 output bias
    out_t = tm * Dp * 4          # f32 output/accumulator tile
    # every operand is double-buffered by the pipeline; +25% headroom + 1 MiB slack
    return int(2 * (x_t + wv_t + bwv_t + w2_t + b2_t + out_t) * 1.25) + (1 << 20)


# ---------------------------------------------------------------------------
# Forward wrapper (hot path: only pads/casts the activations)
# ---------------------------------------------------------------------------
def swiglu_pallas(x, prep, *, tm=None, vmem_cap_bytes=None):
    """x: (M, D). `prep` comes from prepare_swiglu_params(). Returns (M, D)."""
    orig_dtype = x.dtype
    M, D = x.shape
    assert D == prep["D"], f"feature dim {D} != prepared {prep['D']}"
    Dp, H, th = prep["Dp"], prep["H"], prep["th"]
    nh = H // th

    gen = _chip_generation()
    tm_target, _, cap = _default_config(gen)
    if tm is None:
        tm = tm_target
    if vmem_cap_bytes is None:
        vmem_cap_bytes = cap

    # Adaptive token tile: never pad small / decode-sized M up to a huge tile.
    tm = max(8, min(tm, _round_up(M, 128)))
    # Shrink tm until the double-buffered working set fits the per-core VMEM budget.
    while tm > 128 and _tile_vmem_bytes(tm, th, Dp) > vmem_cap_bytes:
        tm = max(128, _round_up(tm // 2, 8))
    vmem_limit = int(min(max(_tile_vmem_bytes(tm, th, Dp), 32 << 20), vmem_cap_bytes))

    Mp = _round_up(M, tm)
    x_p = x
    if Dp != D:
        x_p = jnp.pad(x_p, ((0, 0), (0, Dp - D)))
    if Mp != M:
        x_p = jnp.pad(x_p, ((0, Mp - M), (0, 0)))
    x_bf = x_p.astype(jnp.bfloat16)

    grid = (Mp // tm, nh)

    # Advisory cost hint for XLA's scheduler around the custom call.
    n_tok_tiles = Mp // tm
    flops = 6 * Mp * Dp * H
    bytes_accessed = (
        Mp * Dp * 2                      # x read (bf16)
        + Mp * Dp * 4                    # out write (f32)
        + n_tok_tiles * (Dp * 2 * H * 2  # WV streamed once per token tile
                         + 2 * H * 4     # bWV
                         + H * Dp * 2    # W2
                         + Dp * 4)       # b2
    )
    cost = pl.CostEstimate(
        flops=int(flops), transcendentals=int(Mp * H), bytes_accessed=int(bytes_accessed)
    )

    out = pl.pallas_call(
        swiglu_kernel,
        out_shape=jax.ShapeDtypeStruct((Mp, Dp), jnp.float32),
        grid_spec=pltpu.PrefetchScalarGridSpec(
            num_scalar_prefetch=0,
            grid=grid,
            in_specs=[
                pl.BlockSpec((tm, Dp), lambda i, j: (i, 0)),       # x tile
                pl.BlockSpec((Dp, 2 * th), lambda i, j: (0, j)),   # fused [W|V] tile
                pl.BlockSpec((1, 2 * th), lambda i, j: (0, j)),    # fused [bW|bV] tile
                pl.BlockSpec((th, Dp), lambda i, j: (j, 0)),       # W2 tile
                pl.BlockSpec((1, Dp), lambda i, j: (0, 0)),        # b2
            ],
            out_specs=pl.BlockSpec((tm, Dp), lambda i, j: (i, 0)),
        ),
        compiler_params=pltpu.CompilerParams(
            dimension_semantics=("parallel", "arbitrary"),
            vmem_limit_bytes=vmem_limit,
        ),
        cost_estimate=cost,
    )(x_bf, prep["WV"], prep["bWV"], prep["W2"], prep["b2"])

    out = out[:M, :D]
    if orig_dtype != jnp.float32:
        out = out.astype(orig_dtype)
    return out


# ---------------------------------------------------------------------------
# Reference & init
# ---------------------------------------------------------------------------
def swiglu_ref(x, W, bW, V, bV, W2, b2):
    h_w = x @ W + bW
    h_v = x @ V + bV
    return (jax.nn.silu(h_w) * h_v) @ W2 + b2


def init_params(key, n_embd, hidden_dim, dtype=jnp.float32):
    # Deterministic PyTorch-Linear-style init: U(-1/sqrt(fan_in), 1/sqrt(fan_in)).
    kW, kbW, kV, kbV, kW2, kb2 = jax.random.split(key, 6)
    s1 = 1.0 / jnp.sqrt(n_embd)
    s2 = 1.0 / jnp.sqrt(hidden_dim)
    W = jax.random.uniform(kW, (n_embd, hidden_dim), dtype, -s1, s1)
    bW = jax.random.uniform(kbW, (1, hidden_dim), dtype, -s1, s1)
    V = jax.random.uniform(kV, (n_embd, hidden_dim), dtype, -s1, s1)
    bV = jax.random.uniform(kbV, (1, hidden_dim), dtype, -s1, s1)
    W2 = jax.random.uniform(kW2, (hidden_dim, n_embd), dtype, -s2, s2)
    b2 = jax.random.uniform(kb2, (1, n_embd), dtype, -s2, s2)
    return W, bW, V, bV, W2, b2


if __name__ == "__main__":
    # Small, lane-friendly test shapes: n_embd=128 -> hidden_dim=512. th is forced to
    # 256 so the H axis has 2 steps and the in-place accumulation path is exercised;
    # the 16 tokens map to a single adaptive tm=128 tile (no 256-token padding waste).
    batch, seq, n_embd = 2, 8, 128
    hidden_dim = _get_hidden_dim(n_embd)  # -> 512

    key = jax.random.PRNGKey(0)
    kx, kp = jax.random.split(key)
    x = jax.random.normal(kx, (batch, seq, n_embd), jnp.float32)
    params = init_params(kp, n_embd, hidden_dim)

    # One-time weight preparation (would be cached alongside the parameters).
    prep = prepare_swiglu_params(*params, th=256)

    x2d = x.reshape(batch * seq, n_embd)
    out2d = swiglu_pallas(x2d, prep)
    out = out2d.reshape(batch, seq, n_embd)
    jax.block_until_ready(out)

    # Reference with the same bf16-rounded matmul inputs (biases / gate math in f32),
    # since the kernel deliberately runs the MXU in bf16 with f32 accumulation.
    W, bW, V, bV, W2, b2 = params
    bf = lambda a: a.astype(jnp.bfloat16).astype(jnp.float32)
    ref = swiglu_ref(bf(x2d), bf(W), bW, bf(V), bV, bf(W2), b2).reshape(
        batch, seq, n_embd
    )
    assert jnp.allclose(out, ref, atol=2e-2, rtol=2e-2), "mismatch vs reference"

    print("KERNEL_OK")
</pallas_src>

<mosaic_0001>
module attributes {stable_mosaic.version = 11 : i64} {
  func.func @swiglu_kernel(%arg0: i32, %arg1: i32, %arg2: memref<128x128xbf16, #tpu.memory_space<vmem>>, %arg3: memref<128x512xbf16, #tpu.memory_space<vmem>>, %arg4: memref<1x512xf32, #tpu.memory_space<vmem>>, %arg5: memref<256x128xbf16, #tpu.memory_space<vmem>>, %arg6: memref<1x128xf32, #tpu.memory_space<vmem>>, %arg7: memref<128x128xf32, #tpu.memory_space<vmem>>) attributes {dimension_semantics = [#tpu.dimension_semantics<parallel>, #tpu.dimension_semantics<arbitrary>], iteration_bounds = array<i64: 1, 2>, scalar_prefetch = 0 : i64, scratch_operands = 0 : i64, tpu.core_type = #tpu.core_type<tc>, window_params = [{transform_indices = @transform_0, window_bounds = array<i64: 128, 128>}, {transform_indices = @transform_1, window_bounds = array<i64: 128, 512>}, {transform_indices = @transform_2, window_bounds = array<i64: 1, 512>}, {transform_indices = @transform_3, window_bounds = array<i64: 256, 128>}, {pipeline_mode = #tpu.pipeline_mode<synchronous>, transform_indices = @transform_4, window_bounds = array<i64: 1, 128>}, {transform_indices = @transform_5, window_bounds = array<i64: 128, 128>}]} {
    %c0_i32 = arith.constant 0 : i32
    %0 = arith.cmpi eq, %arg1, %c0_i32 : i32
    %1 = arith.extui %0 : i1 to i32
    %c0_i32_0 = arith.constant 0 : i32
    %2 = arith.cmpi ne, %1, %c0_i32_0 : i32
    scf.if %2 {
      %c0_14 = arith.constant 0 : index
      %c0_15 = arith.constant 0 : index
      %24 = vector.load %arg6[%c0_14, %c0_15] : memref<1x128xf32, #tpu.memory_space<vmem>>, vector<1x128xf32>
      %25 = vector.shape_cast %24 : vector<1x128xf32> to vector<1x128xf32>
      %26 = vector.broadcast %25 : vector<1x128xf32> to vector<128x128xf32>
      %c0_16 = arith.constant 0 : index
      %c0_17 = arith.constant 0 : index
      %27 = vector.load %arg7[%c0_16, %c0_17] : memref<128x128xf32, #tpu.memory_space<vmem>>, vector<128x128xf32>
      tpu.vector_store %arg7[%c0_16, %c0_17], %26 {strides = array<i32>} : memref<128x128xf32, #tpu.memory_space<vmem>>, vector<128x128xf32>,
    } else {
    }
    %c0 = arith.constant 0 : index
    %c0_1 = arith.constant 0 : index
    %3 = vector.load %arg2[%c0, %c0_1] : memref<128x128xbf16, #tpu.memory_space<vmem>>, vector<128x128xbf16>
    %c0_2 = arith.constant 0 : index
    %c0_3 = arith.constant 0 : index
    %4 = vector.load %arg3[%c0_2, %c0_3] : memref<128x512xbf16, #tpu.memory_space<vmem>>, vector<128x512xbf16>
    %cst = arith.constant dense<0.000000e+00> : vector<128x512xf32>
    %5 = tpu.matmul %3, %4, %cst {dimension_numbers = #tpu.dot_dimension_numbers<[1], [0], [0], [1], [0, 0, 1, 1], [], []>} : vector<128x128xbf16>, vector<128x512xbf16>, vector<128x512xf32> -> vector<128x512xf32>
    %c0_4 = arith.constant 0 : index
    %c0_5 = arith.constant 0 : index
    %6 = vector.load %arg4[%c0_4, %c0_5] : memref<1x512xf32, #tpu.memory_space<vmem>>, vector<1x512xf32>
    %7 = vector.broadcast %6 : vector<1x512xf32> to vector<128x512xf32>
    %8 = arith.addf %5, %7 : vector<128x512xf32>
    %9 = vector.extract_strided_slice %8 {offsets = [0, 0], sizes = [128, 256], strides = [1, 1]} : vector<128x512xf32> to vector<128x256xf32>
    %10 = vector.extract_strided_slice %8 {offsets = [0, 256], sizes = [128, 256], strides = [1, 1]} : vector<128x512xf32> to vector<128x256xf32>
    %11 = arith.negf %9 : vector<128x256xf32>
    %12 = math.exp %11 : vector<128x256xf32>
    %cst_6 = arith.constant 1.000000e+00 : f32
    %13 = vector.broadcast %cst_6 : f32 to vector<128x256xf32>
    %14 = arith.addf %13, %12 : vector<128x256xf32>
    %15 = arith.divf %13, %14 : vector<128x256xf32>
    %16 = arith.mulf %9, %15 : vector<128x256xf32>
    %17 = arith.mulf %16, %10 : vector<128x256xf32>
    %c0_7 = arith.constant 0 : index
    %c0_8 = arith.constant 0 : index
    %18 = vector.load %arg7[%c0_7, %c0_8] : memref<128x128xf32, #tpu.memory_space<vmem>>, vector<128x128xf32>
    %19 = arith.truncf %17 : vector<128x256xf32> to vector<128x256xbf16>
    %c0_9 = arith.constant 0 : index
    %c0_10 = arith.constant 0 : index
    %20 = vector.load %arg5[%c0_9, %c0_10] : memref<256x128xbf16, #tpu.memory_space<vmem>>, vector<256x128xbf16>
    %cst_11 = arith.constant dense<0.000000e+00> : vector<128x128xf32>
    %21 = tpu.matmul %19, %20, %cst_11 {dimension_numbers = #tpu.dot_dimension_numbers<[1], [0], [0], [1], [0, 0, 1, 1], [], []>} : vector<128x256xbf16>, vector<256x128xbf16>, vector<128x128xf32> -> vector<128x128xf32>
    %22 = arith.addf %18, %21 : vector<128x128xf32>
    %c0_12 = arith.constant 0 : index
    %c0_13 = arith.constant 0 : index
    %23 = vector.load %arg7[%c0_12, %c0_13] : memref<128x128xf32, #tpu.memory_space<vmem>>, vector<128x128xf32>
    tpu.vector_store %arg7[%c0_12, %c0_13], %22 {strides = array<i32>} : memref<128x128xf32, #tpu.memory_space<vmem>>, vector<128x128xf32>,
    return
  }
  func.func @transform_0(%arg0: i32, %arg1: i32) -> (i32, i32) {
    %c0_i32 = arith.constant 0 : i32
    %c0_i32_0 = arith.constant 0 : i32
    return %arg0, %c0_i32 : i32, i32
  }
  func.func @transform_1(%arg0: i32, %arg1: i32) -> (i32, i32) {
    %c0_i32 = arith.constant 0 : i32
    %c0_i32_0 = arith.constant 0 : i32
    return %c0_i32, %arg1 : i32, i32
  }
  func.func @transform_2(%arg0: i32, %arg1: i32) -> (i32, i32) {
    %c0_i32 = arith.constant 0 : i32
    %c0_i32_0 = arith.constant 0 : i32
    return %c0_i32, %arg1 : i32, i32
  }
  func.func @transform_3(%arg0: i32, %arg1: i32) -> (i32, i32) {
    %c0_i32 = arith.constant 0 : i32
    %c0_i32_0 = arith.constant 0 : i32
    return %arg1, %c0_i32 : i32, i32
  }
  func.func @transform_4(%arg0: i32, %arg1: i32) -> (i32, i32) {
    %c0_i32 = arith.constant 0 : i32
    %c0_i32_0 = arith.constant 0 : i32
    %c0_i32_1 = arith.constant 0 : i32
    return %c0_i32, %c0_i32_0 : i32, i32
  }
  func.func @transform_5(%arg0: i32, %arg1: i32) -> (i32, i32) {
    %c0_i32 = arith.constant 0 : i32
    %c0_i32_0 = arith.constant 0 : i32
    return %arg0, %c0_i32 : i32, i32
  }
}

</mosaic_0001>

<llo_original>
// kernel: tpu_custom_call.1
$region0: #{tpu_custom_call.1}
  #allocation0 [shape = 'u32[]', space=smem, size = 0x4, offset = 0x4, fixed_abs, tag = 'smem constant byte address 0x4 - core index']
  #allocation1 [shape = 'u32[144,128]{1,0:T(1,128)}', space=vmem, size = 0x12000, scoped, tag = 'internal scratch']
  %s0 = inlined_call_operand.hbm [shape: bf16[128,128], index: 0, kind: input, shape index: {}]
  %s1 = inlined_call_operand.hbm [shape: bf16[128,1024], index: 1, kind: input, shape index: {}]
  %s2 = inlined_call_operand.hbm [shape: f32[1,1024], index: 2, kind: input, shape index: {}]
  %s3 = inlined_call_operand.hbm [shape: bf16[512,128], index: 3, kind: input, shape index: {}]
  %s4 = inlined_call_operand.vmem [shape: f32[1,128], index: 4, kind: input, shape index: {}]
  %s5 = inlined_call_operand.hbm [shape: f32[128,128], index: 5, kind: output, shape index: {}]
  %s6 = sld [smem:[#allocation0]]
  $region73: #{tpu_custom_call.1} parent=0
    _
  %s8 = ssub.s32 1, %s6
  %s9 = scalar_select 0, %s8, %s6
  $region1: #{tpu_custom_call.1} parent=0
    #allocation2 [shape = 'u8[32768]{0}', space=vmem, size = 0x8000, scoped, tag = 'input window, operand 0, single buffered']
    #allocation3 [shape = 's32[2]{0}', space=sflag, size = 0x8, scoped, tag = 'scoped memory for tpu_custom_call.1']
    #allocation4 [shape = 's32[2]{0}', space=sflag, size = 0x8, scoped, tag = 'scoped memory for tpu_custom_call.1']
    #allocation5 [shape = 'u8[262144]{0}', space=vmem, size = 0x40000, scoped, tag = 'input window, operand 1']
    #allocation6 [shape = 's32[2]{0}', space=sflag, size = 0x8, scoped, tag = 'scoped memory for tpu_custom_call.1']
    #allocation7 [shape = 'u8[4096]{0}', space=vmem, size = 0x1000, scoped, tag = 'input window, operand 2']
    #allocation8 [shape = 'u8[131072]{0}', space=vmem, size = 0x20000, scoped, tag = 'input window, operand 3']
    #allocation9 [shape = 's32[2]{0}', space=sflag, size = 0x8, scoped, tag = 'scoped memory for tpu_custom_call.1']
    #allocation10 [shape = 'u8[65536]{0}', space=vmem, size = 0x10000, scoped, tag = 'output window, operand 0, single buffered']
    %10 = vsyncpa [#allocation3], 0
    %11 = vsyncpa [#allocation6], 0
    %s12 = scalar_lea.sflag [#allocation6], 1
    %13 = vsyncpa %s12, 0
    %14 = vsyncpa [#allocation9], 0
    %s15 = scalar_lea.sflag [#allocation9], 1
    %16 = vsyncpa %s15, 0
    %17 = vsyncpa [#allocation4], 0
    loop: start=0, step=1, limit=4
    $region2: #{tpu_custom_call.1} parent=1 // loop_pre_header
      _
    $region3: #{tpu_custom_call.1} parent=1 // loop_header
      %s19 = sphi 0, %s23
      %p20 = scmp.ge.s32.totalorder %s19, 4
      %s26 = sphi 0, %s38
      %s27 = sphi 0, %s34
      %s28 = sphi 0, %s26
      %s29 = sphi 0, %s27
      %s30 = sphi 0, %s28
      %s31 = sphi 0, %s29
      %s41 = sphi 0, %s43
      %s44 = sphi 0, %s41
      %s45 = sphi 0, %s44
      %s61 = sphi 0, %s45
      %s67 = sphi 0, %s69
      %s70 = sphi 0, %s67
      %s71 = sphi 0, %s70
      %s87 = sphi 0, %s71
      %s93 = sphi 0, %s95
      %s96 = sphi 0, %s93
      %s97 = sphi 0, %s96
      %s113 = sphi 0, %s97
      %s119 = sphi 0, %s121
      %s122 = sphi 0, %s119
      %s123 = sphi 0, %s122
      %s139 = sphi 0, %s123
      %s143 = sphi 0, %s143
      %s145 = sphi 0, %s143
      %s146 = sphi 0, %s145
      %s160 = sphi 0, %s146
      %s166 = sphi 0, %s168
      %s169 = sphi 0, %s166
      %s170 = sphi 0, %s169
      %s186 = sphi 0, %s170
    $region4: #{tpu_custom_call.1} parent=1 // loop_header_branch
      %22 = sbr.rel (%p20) target = $region8
    $region5: #{tpu_custom_call.1} parent=1 // loop_body
      %s24 = ssub.s32 %s19, 1
      %s25 = ssub.s32 %s19, 2
      %s32 = sadd.s32 1, %s27
      %p33 = scmp.ge.s32.totalorder %s32, 2
      %s34 = scalar_select %p33, 0, %s32
      %s35 = sadd.s32 1, %s26
      %s36 = scalar_select %p33, %s35, %s26
      %p37 = scmp.ge.s32.totalorder %s36, 1
      %s38 = scalar_select %p37, 0, %s36
      %s39 = ssub.s32 %s26, %s38
      %p40 = scmp.eq.s32.totalorder %s39, 0
      %s42 = sadd.s32 %s41, 1
      %s43 = scalar_select %p40, %s41, %s42
      %p46 = pneg %p40
      %p47 = scmp.eq.s32.totalorder %s19, 1
      %p48 = por %p46, %p47
      %p49 = scmp.ne.s32.totalorder %s41, %s44
      %p50 = scmp.eq.s32.totalorder %s19, 0
      %p51 = por %p49, %p50
      %p52 = scmp.ne.s32.totalorder %s41, %s44
      %p53 = scmp.eq.s32.totalorder %s24, 1
      %p54 = por %p52, %p53
      %p55 = scmp.ne.s32.totalorder %s44, %s45
      %p56 = scmp.eq.s32.totalorder %s24, 0
      %p57 = por %p55, %p56
      %p58 = scmp.ne.s32.totalorder %s44, %s45
      %p59 = scmp.eq.s32.totalorder %s25, 1
      %p60 = por %p58, %p59
      %p62 = scmp.ne.s32.totalorder %s45, %s61
      %p63 = scmp.eq.s32.totalorder %s25, 0
      %p64 = por %p62, %p63
      %s65 = ssub.s32 %s27, %s34
      %p66 = scmp.eq.s32.totalorder %s65, 0
      %s68 = sadd.s32 %s67, 1
      %s69 = scalar_select %p66, %s67, %s68
      %p72 = pneg %p66
      %p73 = scmp.eq.s32.totalorder %s19, 1
      %p74 = por %p72, %p73
      %p75 = scmp.ne.s32.totalorder %s67, %s70
      %p76 = scmp.eq.s32.totalorder %s19, 0
      %p77 = por %p75, %p76
      %p78 = scmp.ne.s32.totalorder %s67, %s70
      %p79 = scmp.eq.s32.totalorder %s24, 1
      %p80 = por %p78, %p79
      %p81 = scmp.ne.s32.totalorder %s70, %s71
      %p82 = scmp.eq.s32.totalorder %s24, 0
      %p83 = por %p81, %p82
      %p84 = scmp.ne.s32.totalorder %s70, %s71
      %p85 = scmp.eq.s32.totalorder %s25, 1
      %p86 = por %p84, %p85
      %p88 = scmp.ne.s32.totalorder %s71, %s87
      %p89 = scmp.eq.s32.totalorder %s25, 0
      %p90 = por %p88, %p89
      %s91 = ssub.s32 %s27, %s34
      %p92 = scmp.eq.s32.totalorder %s91, 0
      %s94 = sadd.s32 %s93, 1
      %s95 = scalar_select %p92, %s93, %s94
      %p98 = pneg %p92
      %p99 = scmp.eq.s32.totalorder %s19, 1
      %p100 = por %p98, %p99
      %p101 = scmp.ne.s32.totalorder %s93, %s96
      %p102 = scmp.eq.s32.totalorder %s19, 0
      %p103 = por %p101, %p102
      %p104 = scmp.ne.s32.totalorder %s93, %s96
      %p105 = scmp.eq.s32.totalorder %s24, 1
      %p106 = por %p104, %p105
      %p107 = scmp.ne.s32.totalorder %s96, %s97
      %p108 = scmp.eq.s32.totalorder %s24, 0
      %p109 = por %p107, %p108
      %p110 = scmp.ne.s32.totalorder %s96, %s97
      %p111 = scmp.eq.s32.totalorder %s25, 1
      %p112 = por %p110, %p111
      %p114 = scmp.ne.s32.totalorder %s97, %s113
      %p115 = scmp.eq.s32.totalorder %s25, 0
      %p116 = por %p114, %p115
      %s117 = ssub.s32 %s27, %s34
      %p118 = scmp.eq.s32.totalorder %s117, 0
      %s120 = sadd.s32 %s119, 1
      %s121 = scalar_select %p118, %s119, %s120
      %p124 = pneg %p118
      %p125 = scmp.eq.s32.totalorder %s19, 1
      %p126 = por %p124, %p125
      %p127 = scmp.ne.s32.totalorder %s119, %s122
      %p128 = scmp.eq.s32.totalorder %s19, 0
      %p129 = por %p127, %p128
      %p130 = scmp.ne.s32.totalorder %s119, %s122
      %p131 = scmp.eq.s32.totalorder %s24, 1
      %p132 = por %p130, %p131
      %p133 = scmp.ne.s32.totalorder %s122, %s123
      %p134 = scmp.eq.s32.totalorder %s24, 0
      %p135 = por %p133, %p134
      %p136 = scmp.ne.s32.totalorder %s122, %s123
      %p137 = scmp.eq.s32.totalorder %s25, 1
      %p138 = por %p136, %p137
      %p140 = scmp.ne.s32.totalorder %s123, %s139
      %p141 = scmp.eq.s32.totalorder %s25, 0
      %p142 = por %p140, %p141
      %s144 = sadd.s32 %s143, 1
      %p147 = scmp.eq.s32.totalorder %s19, 1
      %p148 = scmp.ne.s32.totalorder %s143, %s145
      %p149 = scmp.eq.s32.totalorder %s19, 0
      %p150 = por %p148, %p149
      %p151 = scmp.ne.s32.totalorder %s143, %s145
      %p152 = scmp.eq.s32.totalorder %s24, 1
      %p153 = por %p151, %p152
      %p154 = scmp.ne.s32.totalorder %s145, %s146
      %p155 = scmp.eq.s32.totalorder %s24, 0
      %p156 = por %p154, %p155
      %p157 = scmp.ne.s32.totalorder %s145, %s146
      %p158 = scmp.eq.s32.totalorder %s25, 1
      %p159 = por %p157, %p158
      %p161 = scmp.ne.s32.totalorder %s146, %s160
      %p162 = scmp.eq.s32.totalorder %s25, 0
      %p163 = por %p161, %p162
      %s164 = ssub.s32 %s26, %s38
      %p165 = scmp.eq.s32.totalorder %s164, 0
      %s167 = sadd.s32 %s166, 1
      %s168 = scalar_select %p165, %s166, %s167
      %p171 = pneg %p165
      %p172 = scmp.eq.s32.totalorder %s19, 1
      %p173 = por %p171, %p172
      %p174 = scmp.ne.s32.totalorder %s166, %s169
      %p175 = scmp.eq.s32.totalorder %s19, 0
      %p176 = por %p174, %p175
      %p177 = scmp.ne.s32.totalorder %s166, %s169
      %p178 = scmp.eq.s32.totalorder %s24, 1
      %p179 = por %p177, %p178
      %p180 = scmp.ne.s32.totalorder %s169, %s170
      %p181 = scmp.eq.s32.totalorder %s24, 0
      %p182 = por %p180, %p181
      %p183 = scmp.ne.s32.totalorder %s169, %s170
      %p184 = scmp.eq.s32.totalorder %s25, 1
      %p185 = por %p183, %p184
      %p187 = scmp.ne.s32.totalorder %s170, %s186
      %p188 = scmp.eq.s32.totalorder %s25, 0
      %p189 = por %p187, %p188
      %p190 = scmp.le.s32.totalorder 1, %s19
      %p191 = scmp.lt.s32.totalorder %s19, 3
      %p192 = pnand %p190, %p191
      %p193 = pneg %p192
      // Predicated region
      $region9: #{tpu_custom_call.1} parent=5 // pred_check
        _
      $region10: #{tpu_custom_call.1} parent=5 // pred_check_branch
        %195 = sbr.rel (%p192) target = $region12
      $region11: #{tpu_custom_call.1} parent=5 // pred_region
        %s196 = ssub.s32 %s19, 1
        // Predicated region
        $region13: #{tpu_custom_call.1} parent=11 // pred_check
          %p197 = pneg %p57
        $region14: #{tpu_custom_call.1} parent=11 // pred_check_branch
          %199 = sbr.rel (%p197) target = $region16
        $region15: #{tpu_custom_call.1} parent=11 // pred_region
          %s200 = smul.u32 16, %s28
          %s202 = ssub.s32 1024, 1024
          %203 = vsyncadd [#allocation3], %s202
          %s204 = smul.addr %s200, 64
          %s205 = scalar_lea.hbm %s0, %s204
          %s206 = sshll.u32 [#allocation2], 4
          %s207 = int_to_ptr.vmem [resolvable:$true] %s206
          %212 = dma.hbm_to_vmem [thread:$0]  %s205, 1024, %s207, [#allocation3], 64, 64, 4
        $region16: #{tpu_custom_call.1} parent=11 // pred_fallthru
          _
        // Predicated region
        $region17: #{tpu_custom_call.1} parent=11 // pred_check
          %p213 = pneg %p156
        $region18: #{tpu_custom_call.1} parent=11 // pred_check_branch
          %215 = sbr.rel (%p213) target = $region20
        $region19: #{tpu_custom_call.1} parent=11 // pred_region
          _
        $region20: #{tpu_custom_call.1} parent=11 // pred_fallthru
          _
      $region12: #{tpu_custom_call.1} parent=5 // pred_fallthru
        _
      %p216 = scmp.lt.s32.totalorder %s19, 2
      // Predicated region
      $region21: #{tpu_custom_call.1} parent=5 // pred_check
        %p217 = pneg %p216
      $region22: #{tpu_custom_call.1} parent=5 // pred_check_branch
        %219 = sbr.rel (%p217) target = $region24
      $region23: #{tpu_custom_call.1} parent=5 // pred_region
        // Predicated region
        $region25: #{tpu_custom_call.1} parent=23 // pred_check
          %p220 = pneg %p77
        $region26: #{tpu_custom_call.1} parent=23 // pred_check_branch
          %222 = sbr.rel (%p220) target = $region28
        $region27: #{tpu_custom_call.1} parent=23 // pred_region
          %s223 = sand.u32 %s19, 1
          %s224 = scalar_lea.sflag [#allocation6], %s223
          %s225 = sand.u32 %s67, 1
          %s226 = smul.addr %s225, 256
          %s227 = scalar_lea.vmem [#allocation5], %s226
          %s228 = smul.u32 4, %s27
          %s230 = ssub.s32 4096, 4096
          %231 = vsyncadd %s224, %s230
          %s232 = smul.addr %s228, 64
          %s233 = scalar_lea.hbm %s1, %s232
          %s234 = sshll.u32 %s227, 4
          %s235 = int_to_ptr.vmem [resolvable:$true] %s234
          %240 = dma.hbm_to_vmem [thread:$0]  %s233, 4096, %s235, %s224, 512, 256, 16
        $region28: #{tpu_custom_call.1} parent=23 // pred_fallthru
          _
        // Predicated region
        $region29: #{tpu_custom_call.1} parent=23 // pred_check
          %p241 = pneg %p103
        $region30: #{tpu_custom_call.1} parent=23 // pred_check_branch
          %243 = sbr.rel (%p241) target = $region32
        $region31: #{tpu_custom_call.1} parent=23 // pred_region
          %s244 = sand.u32 %s19, 1
          %s245 = scalar_lea.sflag [#allocation6], %s244
          %s246 = sand.u32 %s93, 1
          %s247 = smul.addr %s246, 4
          %s248 = scalar_lea.vmem [#allocation7], %s247
          %s249 = smul.u32 4, %s27
          %s251 = ssub.s32 64, 64
          %252 = vsyncadd %s245, %s251
          %s253 = smul.addr %s249, 16
          %s254 = scalar_lea.hbm %s2, %s253
          %s256 = sshll.u32 %s248, 4
          %s257 = int_to_ptr.vmem [resolvable:$true] %s256
          %259 = dma.hbm_to_vmem [thread:$0]  %s254, 64, %s257, %s245
        $region32: #{tpu_custom_call.1} parent=23 // pred_fallthru
          _
        // Predicated region
        $region33: #{tpu_custom_call.1} parent=23 // pred_check
          %p260 = pneg %p129
        $region34: #{tpu_custom_call.1} parent=23 // pred_check_branch
          %262 = sbr.rel (%p260) target = $region36
        $region35: #{tpu_custom_call.1} parent=23 // pred_region
          %s263 = sand.u32 %s119, 1
          %s264 = scalar_lea.sflag [#allocation9], %s263
          %s265 = sand.u32 %s119, 1
          %s266 = smul.addr %s265, 128
          %s267 = scalar_lea.vmem [#allocation8], %s266
          %s268 = smul.u32 32, %s27
          %s270 = ssub.s32 2048, 2048
          %271 = vsyncadd %s264, %s270
          %s272 = smul.addr %s268, 64
          %s273 = scalar_lea.hbm %s3, %s272
          %s274 = sshll.u32 %s267, 4
          %s275 = int_to_ptr.vmem [resolvable:$true] %s274
          %280 = dma.hbm_to_vmem [thread:$0]  %s273, 2048, %s275, %s264, 64, 64, 4
        $region36: #{tpu_custom_call.1} parent=23 // pred_fallthru
          _
      $region24: #{tpu_custom_call.1} parent=5 // pred_fallthru
        _
      %p281 = scmp.le.s32.totalorder 1, %s19
      %p282 = scmp.lt.s32.totalorder %s19, 3
      %p283 = pnand %p281, %p282
      %p284 = pneg %p283
      // Predicated region
      $region37: #{tpu_custom_call.1} parent=5 // pred_check
        _
      $region38: #{tpu_custom_call.1} parent=5 // pred_check_branch
        %286 = sbr.rel (%p283) target = $region40
      $region39: #{tpu_custom_call.1} parent=5 // pred_region
        %s287 = ssub.s32 %s19, 1
        // Predicated region
        $region41: #{tpu_custom_call.1} parent=39 // pred_check
          %p288 = pneg %p57
        $region42: #{tpu_custom_call.1} parent=39 // pred_check_branch
          %290 = sbr.rel (%p288) target = $region44
        $region43: #{tpu_custom_call.1} parent=39 // pred_region
          %291 = dma.done [#allocation3], 1024
        $region44: #{tpu_custom_call.1} parent=39 // pred_fallthru
          _
        %s292 = sand.u32 %s24, 1
        %s293 = scalar_lea.sflag [#allocation6], %s292
        %s294 = sand.u32 %s70, 1
        %s295 = smul.addr %s294, 256
        %s296 = scalar_lea.vmem [#allocation5], %s295
        // Predicated region
        $region45: #{tpu_custom_call.1} parent=39 // pred_check
          %p297 = pneg %p83
        $region46: #{tpu_custom_call.1} parent=39 // pred_check_branch
          %299 = sbr.rel (%p297) target = $region48
        $region47: #{tpu_custom_call.1} parent=39 // pred_region
          %300 = dma.done %s293, 4096
        $region48: #{tpu_custom_call.1} parent=39 // pred_fallthru
          _
        %s301 = sand.u32 %s24, 1
        %s302 = scalar_lea.sflag [#allocation6], %s301
        %s303 = sand.u32 %s96, 1
        %s304 = smul.addr %s303, 4
        %s305 = scalar_lea.vmem [#allocation7], %s304
        // Predicated region
        $region49: #{tpu_custom_call.1} parent=39 // pred_check
          %p306 = pneg %p109
        $region50: #{tpu_custom_call.1} parent=39 // pred_check_branch
          %308 = sbr.rel (%p306) target = $region52
        $region51: #{tpu_custom_call.1} parent=39 // pred_region
          %309 = dma.done %s302, 64
        $region52: #{tpu_custom_call.1} parent=39 // pred_fallthru
          _
        %s310 = sand.u32 %s122, 1
        %s311 = scalar_lea.sflag [#allocation9], %s310
        %s312 = sand.u32 %s122, 1
        %s313 = smul.addr %s312, 128
        %s314 = scalar_lea.vmem [#allocation8], %s313
        // Predicated region
        $region53: #{tpu_custom_call.1} parent=39 // pred_check
          %p315 = pneg %p135
        $region54: #{tpu_custom_call.1} parent=39 // pred_check_branch
          %317 = sbr.rel (%p315) target = $region56
        $region55: #{tpu_custom_call.1} parent=39 // pred_region
          %318 = dma.done %s311, 2048
        $region56: #{tpu_custom_call.1} parent=39 // pred_fallthru
          _
        %p319 = pneg %p57
        %p320 = pneg %p54
        %s321 = sand.u32 %s24, 1
        %s322 = scalar_lea.sflag [#allocation6], %s321
        %s323 = sand.u32 %s70, 1
        %s324 = smul.addr %s323, 256
        %s325 = scalar_lea.vmem [#allocation5], %s324
        %p326 = pneg %p83
        %p327 = pneg %p80
        %s328 = sand.u32 %s24, 1
        %s329 = scalar_lea.sflag [#allocation6], %s328
        %s330 = sand.u32 %s96, 1
        %s331 = smul.addr %s330, 4
        %s332 = scalar_lea.vmem [#allocation7], %s331
        %p333 = pneg %p109
        %p334 = pneg %p106
        %s335 = sand.u32 %s122, 1
        %s336 = scalar_lea.sflag [#allocation9], %s335
        %s337 = sand.u32 %s122, 1
        %s338 = smul.addr %s337, 128
        %s339 = scalar_lea.vmem [#allocation8], %s338
        %p340 = pneg %p135
        %p341 = pneg %p132
        %p342 = pneg %p156
        %p343 = pneg %p153
        %p344 = pneg %p182
        %p345 = pneg %p179
        %s346 = smul.u32 16, %s28
        %s347 = smul.u32 4, %s29
        %s348 = smul.u32 4, %s29
        %s349 = smul.u32 32, %s29
        %s350 = smul.u32 16, %s28
        %p352 = scmp.eq.s32.totalorder %s29, 0
        // Predicated region
        $region57: #{tpu_custom_call.1} parent=39 // pred_check
          %p353 = pneg %p352
        $region58: #{tpu_custom_call.1} parent=39 // pred_check_branch
          %355 = sbr.rel (%p353) target = $region60
        $region59: #{tpu_custom_call.1} parent=39 // pred_region
          %v356 = vld [vmem:[%s4] sm:$0x1]
          %v358 = vlaneseq
          %v359 = vshrl.u32 %v358, 7
          %v360 = vsub.s32 0, %v359
          %v361 = vrot.slane %v356, %v360
          %363 = vst [vmem:[#allocation10] sm:$0xff] %v361
          %364 = vst [vmem:[#allocation10 + $0x8] sm:$0xff] %v361
          %365 = vst [vmem:[#allocation10 + $0x10] sm:$0xff] %v361
          %366 = vst [vmem:[#allocation10 + $0x18] sm:$0xff] %v361
          %367 = vst [vmem:[#allocation10 + $0x20] sm:$0xff] %v361
          %368 = vst [vmem:[#allocation10 + $0x28] sm:$0xff] %v361
          %369 = vst [vmem:[#allocation10 + $0x30] sm:$0xff] %v361
          %370 = vst [vmem:[#allocation10 + $0x38] sm:$0xff] %v361
          %371 = vst [vmem:[#allocation10 + $0x40] sm:$0xff] %v361
          %372 = vst [vmem:[#allocation10 + $0x48] sm:$0xff] %v361
          %373 = vst [vmem:[#allocation10 + $0x50] sm:$0xff] %v361
          %374 = vst [vmem:[#allocation10 + $0x58] sm:$0xff] %v361
          %375 = vst [vmem:[#allocation10 + $0x60] sm:$0xff] %v361
          %376 = vst [vmem:[#allocation10 + $0x68] sm:$0xff] %v361
          %377 = vst [vmem:[#allocation10 + $0x70] sm:$0xff] %v361
          %378 = vst [vmem:[#allocation10 + $0x78] sm:$0xff] %v361
        $region60: #{tpu_custom_call.1} parent=39 // pred_fallthru
          _
        %v379 = vld [vmem:[#allocation2] sm:$0xf]
        %v380 = vld [vmem:[#allocation2 + $0x4] sm:$0xf]
        %v381 = vld [vmem:[#allocation2 + $0x8] sm:$0xf]
        %v382 = vld [vmem:[#allocation2 + $0xc] sm:$0xf]
        %v383 = vld [vmem:[#allocation2 + $0x10] sm:$0xf]
        %v384 = vld [vmem:[#allocation2 + $0x14] sm:$0xf]
        %v385 = vld [vmem:[#allocation2 + $0x18] sm:$0xf]
        %v386 = vld [vmem:[#allocation2 + $0x1c] sm:$0xf]
        %v387 = vld [vmem:[#allocation2 + $0x20] sm:$0xf]
        %v388 = vld [vmem:[#allocation2 + $0x24] sm:$0xf]
        %v389 = vld [vmem:[#allocation2 + $0x28] sm:$0xf]
        %v390 = vld [vmem:[#allocation2 + $0x2c] sm:$0xf]
        %v391 = vld [vmem:[#allocation2 + $0x30] sm:$0xf]
        %v392 = vld [vmem:[#allocation2 + $0x34] sm:$0xf]
        %v393 = vld [vmem:[#allocation2 + $0x38] sm:$0xf]
        %v394 = vld [vmem:[#allocation2 + $0x3c] sm:$0xf]
        %v395 = vld [vmem:[%s296] sm:$0xff]
        %v396 = vld [vmem:[%s296 + $0x8] sm:$0xff]
        %v397 = vld [vmem:[%s296 + $0x10] sm:$0xff]
        %v398 = vld [vmem:[%s296 + $0x18] sm:$0xff]
        %v399 = vld [vmem:[%s296 + $0x20] sm:$0xff]
        %v400 = vld [vmem:[%s296 + $0x28] sm:$0xff]
        %v401 = vld [vmem:[%s296 + $0x30] sm:$0xff]
        %v402 = vld [vmem:[%s296 + $0x38] sm:$0xff]
        %v403 = vld [vmem:[%s296 + $0x40] sm:$0xff]
        %v404 = vld [vmem:[%s296 + $0x48] sm:$0xff]
        %v405 = vld [vmem:[%s296 + $0x50] sm:$0xff]
        %v406 = vld [vmem:[%s296 + $0x58] sm:$0xff]
        %v407 = vld [vmem:[%s296 + $0x60] sm:$0xff]
        %v408 = vld [vmem:[%s296 + $0x68] sm:$0xff]
        %v409 = vld [vmem:[%s296 + $0x70] sm:$0xff]
        %v410 = vld [vmem:[%s296 + $0x78] sm:$0xff]
        %v411 = vld [vmem:[%s296 + $0x80] sm:$0xff]
        %v412 = vld [vmem:[%s296 + $0x88] sm:$0xff]
        %v413 = vld [vmem:[%s296 + $0x90] sm:$0xff]
        %v414 = vld [vmem:[%s296 + $0x98] sm:$0xff]
        %v415 = vld [vmem:[%s296 + $0xa0] sm:$0xff]
        %v416 = vld [vmem:[%s296 + $0xa8] sm:$0xff]
        %v417 = vld [vmem:[%s296 + $0xb0] sm:$0xff]
        %v418 = vld [vmem:[%s296 + $0xb8] sm:$0xff]
        %v419 = vld [vmem:[%s296 + $0xc0] sm:$0xff]
        %v420 = vld [vmem:[%s296 + $0xc8] sm:$0xff]
        %v421 = vld [vmem:[%s296 + $0xd0] sm:$0xff]
        %v422 = vld [vmem:[%s296 + $0xd8] sm:$0xff]
        %v423 = vld [vmem:[%s296 + $0xe0] sm:$0xff]
        %v424 = vld [vmem:[%s296 + $0xe8] sm:$0xff]
        %v425 = vld [vmem:[%s296 + $0xf0] sm:$0xff]
        %v426 = vld [vmem:[%s296 + $0xf8] sm:$0xff]
        %v427 = vld [vmem:[%s305] sm:$0xf]
        %v429 = vlaneseq
        %v430 = vshrl.u32 %v429, 7
        %v431 = vsub.s32 0, %v430
        %v432 = vrot.slane %v427, %v431
        %v433 = vlaneseq
        %v434 = vshrl.u32 %v433, 7
        %v435 = vsub.s32 1, %v434
        %v436 = vrot.slane %v427, %v435
        %v437 = vlaneseq
        %v438 = vshrl.u32 %v437, 7
        %v439 = vsub.s32 2, %v438
        %v440 = vrot.slane %v427, %v439
        %v441 = vlaneseq
        %v442 = vshrl.u32 %v441, 7
        %v443 = vsub.s32 3, %v442
        %v444 = vrot.slane %v427, %v443
        %v465 = vunpack.c.l.b16 %v379
        %v466 = vunpack.c.l.b16 %v380
        %v467 = vunpack.c.l.b16 %v381
        %v468 = vunpack.c.l.b16 %v382
        %v469 = vunpack.c.l.b16 %v383
        %v470 = vunpack.c.l.b16 %v384
        %v471 = vunpack.c.l.b16 %v385
        %v472 = vunpack.c.l.b16 %v386
        %v473 = vunpack.c.l.b16 %v387
        %v474 = vunpack.c.l.b16 %v388
        %v475 = vunpack.c.l.b16 %v389
        %v476 = vunpack.c.l.b16 %v390
        %v477 = vunpack.c.l.b16 %v391
        %v478 = vunpack.c.l.b16 %v392
        %v479 = vunpack.c.l.b16 %v393
        %v480 = vunpack.c.l.b16 %v394
        %v481 = vpack.c.b16 %v466, %v465
        %v482 = vpack.c.b16 %v468, %v467
        %v483 = vpack.c.b16 %v470, %v469
        %v484 = vpack.c.b16 %v472, %v471
        %v485 = vpack.c.b16 %v474, %v473
        %v486 = vpack.c.b16 %v476, %v475
        %v487 = vpack.c.b16 %v478, %v477
        %v488 = vpack.c.b16 %v480, %v479
        %v529 = vunpack.c.l.b16 %v395
        %v530 = vunpack.c.h.b16 %v395
        %v531 = vunpack.c.l.b16 %v396
        %v532 = vunpack.c.h.b16 %v396
        %v533 = vunpack.c.l.b16 %v397
        %v534 = vunpack.c.h.b16 %v397
        %v535 = vunpack.c.l.b16 %v398
        %v536 = vunpack.c.h.b16 %v398
        %v537 = vunpack.c.l.b16 %v399
        %v538 = vunpack.c.h.b16 %v399
        %v539 = vunpack.c.l.b16 %v400
        %v540 = vunpack.c.h.b16 %v400
        %v541 = vunpack.c.l.b16 %v401
        %v542 = vunpack.c.h.b16 %v401
        %v543 = vunpack.c.l.b16 %v402
        %v544 = vunpack.c.h.b16 %v402
        %v545 = vunpack.c.l.b16 %v403
        %v546 = vunpack.c.h.b16 %v403
        %v547 = vunpack.c.l.b16 %v404
        %v548 = vunpack.c.h.b16 %v404
        %v549 = vunpack.c.l.b16 %v405
        %v550 = vunpack.c.h.b16 %v405
        %v551 = vunpack.c.l.b16 %v406
        %v552 = vunpack.c.h.b16 %v406
        %v553 = vunpack.c.l.b16 %v407
        %v554 = vunpack.c.h.b16 %v407
        %v555 = vunpack.c.l.b16 %v408
        %v556 = vunpack.c.h.b16 %v408
        %v557 = vunpack.c.l.b16 %v409
        %v558 = vunpack.c.h.b16 %v409
        %v559 = vunpack.c.l.b16 %v410
        %v560 = vunpack.c.h.b16 %v410
        %v561 = vunpack.c.l.b16 %v411
        %v562 = vunpack.c.h.b16 %v411
        %v563 = vunpack.c.l.b16 %v412
        %v564 = vunpack.c.h.b16 %v412
        %v565 = vunpack.c.l.b16 %v413
        %v566 = vunpack.c.h.b16 %v413
        %v567 = vunpack.c.l.b16 %v414
        %v568 = vunpack.c.h.b16 %v414
        %v569 = vunpack.c.l.b16 %v415
        %v570 = vunpack.c.h.b16 %v415
        %v571 = vunpack.c.l.b16 %v416
        %v572 = vunpack.c.h.b16 %v416
        %v573 = vunpack.c.l.b16 %v417
        %v574 = vunpack.c.h.b16 %v417
        %v575 = vunpack.c.l.b16 %v418
        %v576 = vunpack.c.h.b16 %v418
        %v577 = vunpack.c.l.b16 %v419
        %v578 = vunpack.c.h.b16 %v419
        %v579 = vunpack.c.l.b16 %v420
        %v580 = vunpack.c.h.b16 %v420
        %v581 = vunpack.c.l.b16 %v421
        %v582 = vunpack.c.h.b16 %v421
        %v583 = vunpack.c.l.b16 %v422
        %v584 = vunpack.c.h.b16 %v422
        %v585 = vunpack.c.l.b16 %v423
        %v586 = vunpack.c.h.b16 %v423
        %v587 = vunpack.c.l.b16 %v424
        %v588 = vunpack.c.h.b16 %v424
        %v589 = vunpack.c.l.b16 %v425
        %v590 = vunpack.c.h.b16 %v425
        %v591 = vunpack.c.l.b16 %v426
        %v592 = vunpack.c.h.b16 %v426
        %v593 = vpack.c.b16 %v533, %v529
        %v594 = vpack.c.b16 %v534, %v530
        %v595 = vpack.c.b16 %v535, %v531
        %v596 = vpack.c.b16 %v536, %v532
        %v597 = vpack.c.b16 %v541, %v537
        %v598 = vpack.c.b16 %v542, %v538
        %v599 = vpack.c.b16 %v543, %v539
        %v600 = vpack.c.b16 %v544, %v540
        %v601 = vpack.c.b16 %v549, %v545
        %v602 = vpack.c.b16 %v550, %v546
        %v603 = vpack.c.b16 %v551, %v547
        %v604 = vpack.c.b16 %v552, %v548
        %v605 = vpack.c.b16 %v557, %v553
        %v606 = vpack.c.b16 %v558, %v554
        %v607 = vpack.c.b16 %v559, %v555
        %v608 = vpack.c.b16 %v560, %v556
        %v609 = vpack.c.b16 %v565, %v561
        %v610 = vpack.c.b16 %v566, %v562
        %v611 = vpack.c.b16 %v567, %v563
        %v612 = vpack.c.b16 %v568, %v564
        %v613 = vpack.c.b16 %v573, %v569
        %v614 = vpack.c.b16 %v574, %v570
        %v615 = vpack.c.b16 %v575, %v571
        %v616 = vpack.c.b16 %v576, %v572
        %v617 = vpack.c.b16 %v581, %v577
        %v618 = vpack.c.b16 %v582, %v578
        %v619 = vpack.c.b16 %v583, %v579
        %v620 = vpack.c.b16 %v584, %v580
        %v621 = vpack.c.b16 %v589, %v585
        %v622 = vpack.c.b16 %v590, %v586
        %v623 = vpack.c.b16 %v591, %v587
        %v624 = vpack.c.b16 %v592, %v588
        %657 = vmatprep.subr.bf16.mxu0 %v594
        %658 = vmatpush1.bf16.msra.mxu0 %v593
        %659 = vmatprep.subr.bf16.mxu0 %v598
        %660 = vmatpush1.bf16.msra.mxu0 %v597
        %661 = vmatprep.subr.bf16.mxu0 %v602
        %662 = vmatpush1.bf16.msra.mxu0 %v601
        %663 = vmatprep.subr.bf16.mxu0 %v606
        %664 = vmatpush1.bf16.msra.mxu0 %v605
        %665 = vmatprep.subr.bf16.mxu0 %v610
        %666 = vmatpush1.bf16.msra.mxu0 %v609
        %667 = vmatprep.subr.bf16.mxu0 %v614
        %668 = vmatpush1.bf16.msra.mxu0 %v613
        %669 = vmatprep.subr.bf16.mxu0 %v618
        %670 = vmatpush1.bf16.msra.mxu0 %v617
        %671 = vmatprep.subr.bf16.mxu0 %v622
        %672 = vmatpush1.bf16.msra.mxu0 %v621
        %673 = vmatprep.subr.bf16.mxu0 0
        %674 = vmatpush1.bf16.msra.mxu0 0
        %675 = vmatprep.subr.bf16.mxu0 0
        %676 = vmatpush1.bf16.msra.mxu0 0
        %677 = vmatprep.subr.bf16.mxu0 0
        %678 = vmatpush1.bf16.msra.mxu0 0
        %679 = vmatprep.subr.bf16.mxu0 0
        %680 = vmatpush1.bf16.msra.mxu0 0
        %681 = vmatprep.subr.bf16.mxu0 0
        %682 = vmatpush1.bf16.msra.mxu0 0
        %683 = vmatprep.subr.bf16.mxu0 0
        %684 = vmatpush1.bf16.msra.mxu0 0
        %685 = vmatprep.subr.bf16.mxu0 0
        %686 = vmatpush1.bf16.msra.mxu0 0
        %687 = vmatprep.subr.bf16.mxu0 0
        %688 = vmatpush1.bf16.msra.mxu0 0
        %689 = vmatprep.mubr.bf16.mxu0 0
        %690 = vmatmul.mubr.bf16.gmra.mrb[0].mxu0 %v481
        %v691 = vpop.f32.mrb[0].mxu0
        %v692 = vadd.f32 %v432, %v691
        %v693 = vpop.f32.mrb[0].mxu0
        %v694 = vadd.f32 %v436, %v693
        %v695 = vpop.f32.mrb[0].mxu0
        %v696 = vadd.f32 %v432, %v695
        %v697 = vpop.f32.mrb[0].mxu0
        %v698 = vadd.f32 %v436, %v697
        %699 = vmatprep.mubr.bf16.mxu0 0
        %700 = vmatmul.mubr.bf16.gmra.mrb[0].mxu0 %v482
        %v701 = vpop.f32.mrb[0].mxu0
        %v702 = vadd.f32 %v432, %v701
        %v703 = vpop.f32.mrb[0].mxu0
        %v704 = vadd.f32 %v436, %v703
        %v705 = vpop.f32.mrb[0].mxu0
        %v706 = vadd.f32 %v432, %v705
        %v707 = vpop.f32.mrb[0].mxu0
        %v708 = vadd.f32 %v436, %v707
        %709 = vmatprep.mubr.bf16.mxu0 0
        %710 = vmatmul.mubr.bf16.gmra.mrb[0].mxu0 %v483
        %v711 = vpop.f32.mrb[0].mxu0
        %v712 = vadd.f32 %v432, %v711
        %v713 = vpop.f32.mrb[0].mxu0
        %v714 = vadd.f32 %v436, %v713
        %v715 = vpop.f32.mrb[0].mxu0
        %v716 = vadd.f32 %v432, %v715
        %v717 = vpop.f32.mrb[0].mxu0
        %v718 = vadd.f32 %v436, %v717
        %719 = vmatprep.mubr.bf16.mxu0 0
        %720 = vmatmul.mubr.bf16.gmra.mrb[0].mxu0 %v484
        %v721 = vpop.f32.mrb[0].mxu0
        %v722 = vadd.f32 %v432, %v721
        %v723 = vpop.f32.mrb[0].mxu0
        %v724 = vadd.f32 %v436, %v723
        %v725 = vpop.f32.mrb[0].mxu0
        %v726 = vadd.f32 %v432, %v725
        %v727 = vpop.f32.mrb[0].mxu0
        %v728 = vadd.f32 %v436, %v727
        %729 = vmatprep.mubr.bf16.mxu0 0
        %730 = vmatmul.mubr.bf16.gmra.mrb[0].mxu0 %v485
        %v731 = vpop.f32.mrb[0].mxu0
        %v732 = vadd.f32 %v432, %v731
        %v733 = vpop.f32.mrb[0].mxu0
        %v734 = vadd.f32 %v436, %v733
        %v735 = vpop.f32.mrb[0].mxu0
        %v736 = vadd.f32 %v432, %v735
        %v737 = vpop.f32.mrb[0].mxu0
        %v738 = vadd.f32 %v436, %v737
        %739 = vmatprep.mubr.bf16.mxu0 0
        %740 = vmatmul.mubr.bf16.gmra.mrb[0].mxu0 %v486
        %v741 = vpop.f32.mrb[0].mxu0
        %v742 = vadd.f32 %v432, %v741
        %v743 = vpop.f32.mrb[0].mxu0
        %v744 = vadd.f32 %v436, %v743
        %v745 = vpop.f32.mrb[0].mxu0
        %v746 = vadd.f32 %v432, %v745
        %v747 = vpop.f32.mrb[0].mxu0
        %v748 = vadd.f32 %v436, %v747
        %749 = vmatprep.mubr.bf16.mxu0 0
        %750 = vmatmul.mubr.bf16.gmra.mrb[0].mxu0 %v487
        %v751 = vpop.f32.mrb[0].mxu0
        %v752 = vadd.f32 %v432, %v751
        %v753 = vpop.f32.mrb[0].mxu0
        %v754 = vadd.f32 %v436, %v753
        %v755 = vpop.f32.mrb[0].mxu0
        %v756 = vadd.f32 %v432, %v755
        %v757 = vpop.f32.mrb[0].mxu0
        %v758 = vadd.f32 %v436, %v757
        %759 = vmatprep.mubr.bf16.mxu0 0
        %760 = vmatmul.mubr.bf16.gmra.mrb[0].mxu0 %v488
        %v761 = vpop.f32.mrb[0].mxu0
        %v762 = vadd.f32 %v432, %v761
        %v763 = vpop.f32.mrb[0].mxu0
        %v764 = vadd.f32 %v436, %v763
        %v765 = vpop.f32.mrb[0].mxu0
        %v766 = vadd.f32 %v432, %v765
        %v767 = vpop.f32.mrb[0].mxu0
        %v768 = vadd.f32 %v436, %v767
        %769 = vdwg.mxu0
        %770 = vmatprep.subr.bf16.mxu0 %v596
        %771 = vmatpush1.bf16.msra.mxu0 %v595
        %772 = vmatprep.subr.bf16.mxu0 %v600
        %773 = vmatpush1.bf16.msra.mxu0 %v599
        %774 = vmatprep.subr.bf16.mxu0 %v604
        %775 = vmatpush1.bf16.msra.mxu0 %v603
        %776 = vmatprep.subr.bf16.mxu0 %v608
        %777 = vmatpush1.bf16.msra.mxu0 %v607
        %778 = vmatprep.subr.bf16.mxu0 %v612
        %779 = vmatpush1.bf16.msra.mxu0 %v611
        %780 = vmatprep.subr.bf16.mxu0 %v616
        %781 = vmatpush1.bf16.msra.mxu0 %v615
        %782 = vmatprep.subr.bf16.mxu0 %v620
        %783 = vmatpush1.bf16.msra.mxu0 %v619
        %784 = vmatprep.subr.bf16.mxu0 %v624
        %785 = vmatpush1.bf16.msra.mxu0 %v623
        %786 = vmatprep.subr.bf16.mxu0 0
        %787 = vmatpush1.bf16.msra.mxu0 0
        %788 = vmatprep.subr.bf16.mxu0 0
        %789 = vmatpush1.bf16.msra.mxu0 0
        %790 = vmatprep.subr.bf16.mxu0 0
        %791 = vmatpush1.bf16.msra.mxu0 0
        %792 = vmatprep.subr.bf16.mxu0 0
        %793 = vmatpush1.bf16.msra.mxu0 0
        %794 = vmatprep.subr.bf16.mxu0 0
        %795 = vmatpush1.bf16.msra.mxu0 0
        %796 = vmatprep.subr.bf16.mxu0 0
        %797 = vmatpush1.bf16.msra.mxu0 0
        %798 = vmatprep.subr.bf16.mxu0 0
        %799 = vmatpush1.bf16.msra.mxu0 0
        %800 = vmatprep.subr.bf16.mxu0 0
        %801 = vmatpush1.bf16.msra.mxu0 0
        %802 = vmatprep.mubr.bf16.mxu0 0
        %803 = vmatmul.mubr.bf16.gmra.mrb[0].mxu0 %v481
        %v804 = vpop.f32.mrb[0].mxu0
        %v805 = vadd.f32 %v440, %v804
        %v806 = vpop.f32.mrb[0].mxu0
        %v807 = vadd.f32 %v444, %v806
        %v808 = vpop.f32.mrb[0].mxu0
        %v809 = vadd.f32 %v440, %v808
        %v810 = vpop.f32.mrb[0].mxu0
        %v811 = vadd.f32 %v444, %v810
        %812 = vmatprep.mubr.bf16.mxu0 0
        %813 = vmatmul.mubr.bf16.gmra.mrb[0].mxu0 %v482
        %v814 = vpop.f32.mrb[0].mxu0
        %v815 = vadd.f32 %v440, %v814
        %v816 = vpop.f32.mrb[0].mxu0
        %v817 = vadd.f32 %v444, %v816
        %v818 = vpop.f32.mrb[0].mxu0
        %v819 = vadd.f32 %v440, %v818
        %v820 = vpop.f32.mrb[0].mxu0
        %v821 = vadd.f32 %v444, %v820
        %822 = vmatprep.mubr.bf16.mxu0 0
        %823 = vmatmul.mubr.bf16.gmra.mrb[0].mxu0 %v483
        %v824 = vpop.f32.mrb[0].mxu0
        %v825 = vadd.f32 %v440, %v824
        %v826 = vpop.f32.mrb[0].mxu0
        %v827 = vadd.f32 %v444, %v826
        %v828 = vpop.f32.mrb[0].mxu0
        %v829 = vadd.f32 %v440, %v828
        %v830 = vpop.f32.mrb[0].mxu0
        %v831 = vadd.f32 %v444, %v830
        %832 = vmatprep.mubr.bf16.mxu0 0
        %833 = vmatmul.mubr.bf16.gmra.mrb[0].mxu0 %v484
        %v834 = vpop.f32.mrb[0].mxu0
        %v835 = vadd.f32 %v440, %v834
        %v836 = vpop.f32.mrb[0].mxu0
        %v837 = vadd.f32 %v444, %v836
        %v838 = vpop.f32.mrb[0].mxu0
        %v839 = vadd.f32 %v440, %v838
        %v840 = vpop.f32.mrb[0].mxu0
        %v841 = vadd.f32 %v444, %v840
        %842 = vmatprep.mubr.bf16.mxu0 0
        %843 = vmatmul.mubr.bf16.gmra.mrb[0].mxu0 %v485
        %v844 = vpop.f32.mrb[0].mxu0
        %v845 = vadd.f32 %v440, %v844
        %v846 = vpop.f32.mrb[0].mxu0
        %v847 = vadd.f32 %v444, %v846
        %v848 = vpop.f32.mrb[0].mxu0
        %v849 = vadd.f32 %v440, %v848
        %v850 = vpop.f32.mrb[0].mxu0
        %v851 = vadd.f32 %v444, %v850
        %852 = vmatprep.mubr.bf16.mxu0 0
        %853 = vmatmul.mubr.bf16.gmra.mrb[0].mxu0 %v486
        %v854 = vpop.f32.mrb[0].mxu0
        %v855 = vadd.f32 %v440, %v854
        %v856 = vpop.f32.mrb[0].mxu0
        %v857 = vadd.f32 %v444, %v856
        %v858 = vpop.f32.mrb[0].mxu0
        %v859 = vadd.f32 %v440, %v858
        %v860 = vpop.f32.mrb[0].mxu0
        %v861 = vadd.f32 %v444, %v860
        %862 = vmatprep.mubr.bf16.mxu0 0
        %863 = vmatmul.mubr.bf16.gmra.mrb[0].mxu0 %v487
        %v864 = vpop.f32.mrb[0].mxu0
        %v865 = vadd.f32 %v440, %v864
        %v866 = vpop.f32.mrb[0].mxu0
        %v867 = vadd.f32 %v444, %v866
        %v868 = vpop.f32.mrb[0].mxu0
        %v869 = vadd.f32 %v440, %v868
        %v870 = vpop.f32.mrb[0].mxu0
        %v871 = vadd.f32 %v444, %v870
        %872 = vmatprep.mubr.bf16.mxu0 0
        %873 = vmatmul.mubr.bf16.gmra.mrb[0].mxu0 %v488
        %v874 = vpop.f32.mrb[0].mxu0
        %v875 = vadd.f32 %v440, %v874
        %v876 = vpop.f32.mrb[0].mxu0
        %v877 = vadd.f32 %v444, %v876
        %v878 = vpop.f32.mrb[0].mxu0
        %v879 = vadd.f32 %v440, %v878
        %v880 = vpop.f32.mrb[0].mxu0
        %v881 = vadd.f32 %v444, %v880
        %882 = vdwg.mxu0
        %v883 = vxor.u32 %v692, 2147483648
        %v884 = vxor.u32 %v694, 2147483648
        %v885 = vxor.u32 %v696, 2147483648
        %v886 = vxor.u32 %v698, 2147483648
        %v887 = vxor.u32 %v702, 2147483648
        %v888 = vxor.u32 %v704, 2147483648
        %v889 = vxor.u32 %v706, 2147483648
        %v890 = vxor.u32 %v708, 2147483648
        %v891 = vxor.u32 %v712, 2147483648
        %v892 = vxor.u32 %v714, 2147483648
        %v893 = vxor.u32 %v716, 2147483648
        %v894 = vxor.u32 %v718, 2147483648
        %v895 = vxor.u32 %v722, 2147483648
        %v896 = vxor.u32 %v724, 2147483648
        %v897 = vxor.u32 %v726, 2147483648
        %v898 = vxor.u32 %v728, 2147483648
        %v899 = vxor.u32 %v732, 2147483648
        %v900 = vxor.u32 %v734, 2147483648
        %v901 = vxor.u32 %v736, 2147483648
        %v902 = vxor.u32 %v738, 2147483648
        %v903 = vxor.u32 %v742, 2147483648
        %v904 = vxor.u32 %v744, 2147483648
        %v905 = vxor.u32 %v746, 2147483648
        %v906 = vxor.u32 %v748, 2147483648
        %v907 = vxor.u32 %v752, 2147483648
        %v908 = vxor.u32 %v754, 2147483648
        %v909 = vxor.u32 %v756, 2147483648
        %v910 = vxor.u32 %v758, 2147483648
        %v911 = vxor.u32 %v762, 2147483648
        %v912 = vxor.u32 %v764, 2147483648
        %v913 = vxor.u32 %v766, 2147483648
        %v914 = vxor.u32 %v768, 2147483648
        %v915 = vmul.f32 %v883, 1.442695
        %v916 = vpow.pop %v915
        %v917 = vmul.f32 %v884, 1.442695
        %v918 = vpow.pop %v917
        %v919 = vmul.f32 %v885, 1.442695
        %v920 = vpow.pop %v919
        %v921 = vmul.f32 %v886, 1.442695
        %v922 = vpow.pop %v921
        %v923 = vmul.f32 %v887, 1.442695
        %v924 = vpow.pop %v923
        %v925 = vmul.f32 %v888, 1.442695
        %v926 = vpow.pop %v925
        %v927 = vmul.f32 %v889, 1.442695
        %v928 = vpow.pop %v927
        %v929 = vmul.f32 %v890, 1.442695
        %v930 = vpow.pop %v929
        %v931 = vmul.f32 %v891, 1.442695
        %v932 = vpow.pop %v931
        %v933 = vmul.f32 %v892, 1.442695
        %v934 = vpow.pop %v933
        %v935 = vmul.f32 %v893, 1.442695
        %v936 = vpow.pop %v935
        %v937 = vmul.f32 %v894, 1.442695
        %v938 = vpow.pop %v937
        %v939 = vmul.f32 %v895, 1.442695
        %v940 = vpow.pop %v939
        %v941 = vmul.f32 %v896, 1.442695
        %v942 = vpow.pop %v941
        %v943 = vmul.f32 %v897, 1.442695
        %v944 = vpow.pop %v943
        %v945 = vmul.f32 %v898, 1.442695
        %v946 = vpow.pop %v945
        %v947 = vmul.f32 %v899, 1.442695
        %v948 = vpow.pop %v947
        %v949 = vmul.f32 %v900, 1.442695
        %v950 = vpow.pop %v949
        %v951 = vmul.f32 %v901, 1.442695
        %v952 = vpow.pop %v951
        %v953 = vmul.f32 %v902, 1.442695
        %v954 = vpow.pop %v953
        %v955 = vmul.f32 %v903, 1.442695
        %v956 = vpow.pop %v955
        %v957 = vmul.f32 %v904, 1.442695
        %v958 = vpow.pop %v957
        %v959 = vmul.f32 %v905, 1.442695
        %v960 = vpow.pop %v959
        %v961 = vmul.f32 %v906, 1.442695
        %v962 = vpow.pop %v961
        %v963 = vmul.f32 %v907, 1.442695
        %v964 = vpow.pop %v963
        %v965 = vmul.f32 %v908, 1.442695
        %v966 = vpow.pop %v965
        %v967 = vmul.f32 %v909, 1.442695
        %v968 = vpow.pop %v967
        %v969 = vmul.f32 %v910, 1.442695
        %v970 = vpow.pop %v969
        %v971 = vmul.f32 %v911, 1.442695
        %v972 = vpow.pop %v971
        %v973 = vmul.f32 %v912, 1.442695
        %v974 = vpow.pop %v973
        %v975 = vmul.f32 %v913, 1.442695
        %v976 = vpow.pop %v975
        %v977 = vmul.f32 %v914, 1.442695
        %v978 = vpow.pop %v977
        %v979 = vadd.f32 %v916, 1.0
        %v980 = vadd.f32 %v918, 1.0
        %v981 = vadd.f32 %v920, 1.0
        %v982 = vadd.f32 %v922, 1.0
        %v983 = vadd.f32 %v924, 1.0
        %v984 = vadd.f32 %v926, 1.0
        %v985 = vadd.f32 %v928, 1.0
        %v986 = vadd.f32 %v930, 1.0
        %v987 = vadd.f32 %v932, 1.0
        %v988 = vadd.f32 %v934, 1.0
        %v989 = vadd.f32 %v936, 1.0
        %v990 = vadd.f32 %v938, 1.0
        %v991 = vadd.f32 %v940, 1.0
        %v992 = vadd.f32 %v942, 1.0
        %v993 = vadd.f32 %v944, 1.0
        %v994 = vadd.f32 %v946, 1.0
        %v995 = vadd.f32 %v948, 1.0
        %v996 = vadd.f32 %v950, 1.0
        %v997 = vadd.f32 %v952, 1.0
        %v998 = vadd.f32 %v954, 1.0
        %v999 = vadd.f32 %v956, 1.0
        %v1000 = vadd.f32 %v958, 1.0
        %v1001 = vadd.f32 %v960, 1.0
        %v1002 = vadd.f32 %v962, 1.0
        %v1003 = vadd.f32 %v964, 1.0
        %v1004 = vadd.f32 %v966, 1.0
        %v1005 = vadd.f32 %v968, 1.0
        %v1006 = vadd.f32 %v970, 1.0
        %v1007 = vadd.f32 %v972, 1.0
        %v1008 = vadd.f32 %v974, 1.0
        %v1009 = vadd.f32 %v976, 1.0
        %v1010 = vadd.f32 %v978, 1.0
        %v1011 = vrcp.pop %v979
        %v1012 = vmul.f32 1.0, %v1011
        %v1013 = vrcp.pop %v980
        %v1014 = vmul.f32 1.0, %v1013
        %v1015 = vrcp.pop %v981
        %v1016 = vmul.f32 1.0, %v1015
        %v1017 = vrcp.pop %v982
        %v1018 = vmul.f32 1.0, %v1017
        %v1019 = vrcp.pop %v983
        %v1020 = vmul.f32 1.0, %v1019
        %v1021 = vrcp.pop %v984
        %v1022 = vmul.f32 1.0, %v1021
        %v1023 = vrcp.pop %v985
        %v1024 = vmul.f32 1.0, %v1023
        %v1025 = vrcp.pop %v986
        %v1026 = vmul.f32 1.0, %v1025
        %v1027 = vrcp.pop %v987
        %v1028 = vmul.f32 1.0, %v1027
        %v1029 = vrcp.pop %v988
        %v1030 = vmul.f32 1.0, %v1029
        %v1031 = vrcp.pop %v989
        %v1032 = vmul.f32 1.0, %v1031
        %v1033 = vrcp.pop %v990
        %v1034 = vmul.f32 1.0, %v1033
        %v1035 = vrcp.pop %v991
        %v1036 = vmul.f32 1.0, %v1035
        %v1037 = vrcp.pop %v992
        %v1038 = vmul.f32 1.0, %v1037
        %v1039 = vrcp.pop %v993
        %v1040 = vmul.f32 1.0, %v1039
        %v1041 = vrcp.pop %v994
        %v1042 = vmul.f32 1.0, %v1041
        %v1043 = vrcp.pop %v995
        %v1044 = vmul.f32 1.0, %v1043
        %v1045 = vrcp.pop %v996
        %v1046 = vmul.f32 1.0, %v1045
        %v1047 = vrcp.pop %v997
        %v1048 = vmul.f32 1.0, %v1047
        %v1049 = vrcp.pop %v998
        %v1050 = vmul.f32 1.0, %v1049
        %v1051 = vrcp.pop %v999
        %v1052 = vmul.f32 1.0, %v1051
        %v1053 = vrcp.pop %v1000
        %v1054 = vmul.f32 1.0, %v1053
        %v1055 = vrcp.pop %v1001
        %v1056 = vmul.f32 1.0, %v1055
        %v1057 = vrcp.pop %v1002
        %v1058 = vmul.f32 1.0, %v1057
        %v1059 = vrcp.pop %v1003
        %v1060 = vmul.f32 1.0, %v1059
        %v1061 = vrcp.pop %v1004
        %v1062 = vmul.f32 1.0, %v1061
        %v1063 = vrcp.pop %v1005
        %v1064 = vmul.f32 1.0, %v1063
        %v1065 = vrcp.pop %v1006
        %v1066 = vmul.f32 1.0, %v1065
        %v1067 = vrcp.pop %v1007
        %v1068 = vmul.f32 1.0, %v1067
        %v1069 = vrcp.pop %v1008
        %v1070 = vmul.f32 1.0, %v1069
        %v1071 = vrcp.pop %v1009
        %v1072 = vmul.f32 1.0, %v1071
        %v1073 = vrcp.pop %v1010
        %v1074 = vmul.f32 1.0, %v1073
        %v1075 = vmul.f32 %v692, %v1012
        %v1076 = vmul.f32 %v694, %v1014
        %v1077 = vmul.f32 %v696, %v1016
        %v1078 = vmul.f32 %v698, %v1018
        %v1079 = vmul.f32 %v702, %v1020
        %v1080 = vmul.f32 %v704, %v1022
        %v1081 = vmul.f32 %v706, %v1024
        %v1082 = vmul.f32 %v708, %v1026
        %v1083 = vmul.f32 %v712, %v1028
        %v1084 = vmul.f32 %v714, %v1030
        %v1085 = vmul.f32 %v716, %v1032
        %v1086 = vmul.f32 %v718, %v1034
        %v1087 = vmul.f32 %v722, %v1036
        %v1088 = vmul.f32 %v724, %v1038
        %v1089 = vmul.f32 %v726, %v1040
        %v1090 = vmul.f32 %v728, %v1042
        %v1091 = vmul.f32 %v732, %v1044
        %v1092 = vmul.f32 %v734, %v1046
        %v1093 = vmul.f32 %v736, %v1048
        %v1094 = vmul.f32 %v738, %v1050
        %v1095 = vmul.f32 %v742, %v1052
        %v1096 = vmul.f32 %v744, %v1054
        %v1097 = vmul.f32 %v746, %v1056
        %v1098 = vmul.f32 %v748, %v1058
        %v1099 = vmul.f32 %v752, %v1060
        %v1100 = vmul.f32 %v754, %v1062
        %v1101 = vmul.f32 %v756, %v1064
        %v1102 = vmul.f32 %v758, %v1066
        %v1103 = vmul.f32 %v762, %v1068
        %v1104 = vmul.f32 %v764, %v1070
        %v1105 = vmul.f32 %v766, %v1072
        %v1106 = vmul.f32 %v768, %v1074
        %v1107 = vmul.f32 %v1075, %v805
        %v1108 = vmul.f32 %v1076, %v807
        %v1109 = vmul.f32 %v1077, %v809
        %v1110 = vmul.f32 %v1078, %v811
        %v1111 = vmul.f32 %v1079, %v815
        %v1112 = vmul.f32 %v1080, %v817
        %v1113 = vmul.f32 %v1081, %v819
        %v1114 = vmul.f32 %v1082, %v821
        %v1115 = vmul.f32 %v1083, %v825
        %v1116 = vmul.f32 %v1084, %v827
        %v1117 = vmul.f32 %v1085, %v829
        %v1118 = vmul.f32 %v1086, %v831
        %v1119 = vmul.f32 %v1087, %v835
        %v1120 = vmul.f32 %v1088, %v837
        %v1121 = vmul.f32 %v1089, %v839
        %v1122 = vmul.f32 %v1090, %v841
        %v1123 = vmul.f32 %v1091, %v845
        %v1124 = vmul.f32 %v1092, %v847
        %v1125 = vmul.f32 %v1093, %v849
        %v1126 = vmul.f32 %v1094, %v851
        %v1127 = vmul.f32 %v1095, %v855
        %v1128 = vmul.f32 %v1096, %v857
        %v1129 = vmul.f32 %v1097, %v859
        %v1130 = vmul.f32 %v1098, %v861
        %v1131 = vmul.f32 %v1099, %v865
        %v1132 = vmul.f32 %v1100, %v867
        %v1133 = vmul.f32 %v1101, %v869
        %v1134 = vmul.f32 %v1102, %v871
        %v1135 = vmul.f32 %v1103, %v875
        %v1136 = vmul.f32 %v1104, %v877
        %v1137 = vmul.f32 %v1105, %v879
        %v1138 = vmul.f32 %v1106, %v881
        %v1139 = vld [vmem:[#allocation10] sm:$0xff]
        %v1140 = vld [vmem:[#allocation10 + $0x8] sm:$0xff]
        %v1141 = vld [vmem:[#allocation10 + $0x10] sm:$0xff]
        %v1142 = vld [vmem:[#allocation10 + $0x18] sm:$0xff]
        %v1143 = vld [vmem:[#allocation10 + $0x20] sm:$0xff]
        %v1144 = vld [vmem:[#allocation10 + $0x28] sm:$0xff]
        %v1145 = vld [vmem:[#allocation10 + $0x30] sm:$0xff]
        %v1146 = vld [vmem:[#allocation10 + $0x38] sm:$0xff]
        %v1147 = vld [vmem:[#allocation10 + $0x40] sm:$0xff]
        %v1148 = vld [vmem:[#allocation10 + $0x48] sm:$0xff]
        %v1149 = vld [vmem:[#allocation10 + $0x50] sm:$0xff]
        %v1150 = vld [vmem:[#allocation10 + $0x58] sm:$0xff]
        %v1151 = vld [vmem:[#allocation10 + $0x60] sm:$0xff]
        %v1152 = vld [vmem:[#allocation10 + $0x68] sm:$0xff]
        %v1153 = vld [vmem:[#allocation10 + $0x70] sm:$0xff]
        %v1154 = vld [vmem:[#allocation10 + $0x78] sm:$0xff]
        %v1155 = vpack.c.bf16 %v1109, %v1107
        %v1156 = vpack.c.bf16 %v1110, %v1108
        %v1157 = vpack.c.bf16 %v1113, %v1111
        %v1158 = vpack.c.bf16 %v1114, %v1112
        %v1159 = vpack.c.bf16 %v1117, %v1115
        %v1160 = vpack.c.bf16 %v1118, %v1116
        %v1161 = vpack.c.bf16 %v1121, %v1119
        %v1162 = vpack.c.bf16 %v1122, %v1120
        %v1163 = vpack.c.bf16 %v1125, %v1123
        %v1164 = vpack.c.bf16 %v1126, %v1124
        %v1165 = vpack.c.bf16 %v1129, %v1127
        %v1166 = vpack.c.bf16 %v1130, %v1128
        %v1167 = vpack.c.bf16 %v1133, %v1131
        %v1168 = vpack.c.bf16 %v1134, %v1132
        %v1169 = vpack.c.bf16 %v1137, %v1135
        %v1170 = vpack.c.bf16 %v1138, %v1136
        %v1171 = vld [vmem:[%s314] sm:$0xf]
        %v1172 = vld [vmem:[%s314 + $0x4] sm:$0xf]
        %v1173 = vld [vmem:[%s314 + $0x8] sm:$0xf]
        %v1174 = vld [vmem:[%s314 + $0xc] sm:$0xf]
        %v1175 = vld [vmem:[%s314 + $0x10] sm:$0xf]
        %v1176 = vld [vmem:[%s314 + $0x14] sm:$0xf]
        %v1177 = vld [vmem:[%s314 + $0x18] sm:$0xf]
        %v1178 = vld [vmem:[%s314 + $0x1c] sm:$0xf]
        %v1179 = vld [vmem:[%s314 + $0x20] sm:$0xf]
        %v1180 = vld [vmem:[%s314 + $0x24] sm:$0xf]
        %v1181 = vld [vmem:[%s314 + $0x28] sm:$0xf]
        %v1182 = vld [vmem:[%s314 + $0x2c] sm:$0xf]
        %v1183 = vld [vmem:[%s314 + $0x30] sm:$0xf]
        %v1184 = vld [vmem:[%s314 + $0x34] sm:$0xf]
        %v1185 = vld [vmem:[%s314 + $0x38] sm:$0xf]
        %v1186 = vld [vmem:[%s314 + $0x3c] sm:$0xf]
        %v1187 = vld [vmem:[%s314 + $0x40] sm:$0xf]
        %v1188 = vld [vmem:[%s314 + $0x44] sm:$0xf]
        %v1189 = vld [vmem:[%s314 + $0x48] sm:$0xf]
        %v1190 = vld [vmem:[%s314 + $0x4c] sm:$0xf]
        %v1191 = vld [vmem:[%s314 + $0x50] sm:$0xf]
        %v1192 = vld [vmem:[%s314 + $0x54] sm:$0xf]
        %v1193 = vld [vmem:[%s314 + $0x58] sm:$0xf]
        %v1194 = vld [vmem:[%s314 + $0x5c] sm:$0xf]
        %v1195 = vld [vmem:[%s314 + $0x60] sm:$0xf]
        %v1196 = vld [vmem:[%s314 + $0x64] sm:$0xf]
        %v1197 = vld [vmem:[%s314 + $0x68] sm:$0xf]
        %v1198 = vld [vmem:[%s314 + $0x6c] sm:$0xf]
        %v1199 = vld [vmem:[%s314 + $0x70] sm:$0xf]
        %v1200 = vld [vmem:[%s314 + $0x74] sm:$0xf]
        %v1201 = vld [vmem:[%s314 + $0x78] sm:$0xf]
        %v1202 = vld [vmem:[%s314 + $0x7c] sm:$0xf]
        %v1235 = vunpack.c.l.b16 %v1171
        %v1236 = vunpack.c.l.b16 %v1172
        %v1237 = vunpack.c.l.b16 %v1173
        %v1238 = vunpack.c.l.b16 %v1174
        %v1239 = vunpack.c.l.b16 %v1175
        %v1240 = vunpack.c.l.b16 %v1176
        %v1241 = vunpack.c.l.b16 %v1177
        %v1242 = vunpack.c.l.b16 %v1178
        %v1243 = vunpack.c.l.b16 %v1179
        %v1244 = vunpack.c.l.b16 %v1180
        %v1245 = vunpack.c.l.b16 %v1181
        %v1246 = vunpack.c.l.b16 %v1182
        %v1247 = vunpack.c.l.b16 %v1183
        %v1248 = vunpack.c.l.b16 %v1184
        %v1249 = vunpack.c.l.b16 %v1185
        %v1250 = vunpack.c.l.b16 %v1186
        %v1251 = vunpack.c.l.b16 %v1187
        %v1252 = vunpack.c.l.b16 %v1188
        %v1253 = vunpack.c.l.b16 %v1189
        %v1254 = vunpack.c.l.b16 %v1190
        %v1255 = vunpack.c.l.b16 %v1191
        %v1256 = vunpack.c.l.b16 %v1192
        %v1257 = vunpack.c.l.b16 %v1193
        %v1258 = vunpack.c.l.b16 %v1194
        %v1259 = vunpack.c.l.b16 %v1195
        %v1260 = vunpack.c.l.b16 %v1196
        %v1261 = vunpack.c.l.b16 %v1197
        %v1262 = vunpack.c.l.b16 %v1198
        %v1263 = vunpack.c.l.b16 %v1199
        %v1264 = vunpack.c.l.b16 %v1200
        %v1265 = vunpack.c.l.b16 %v1201
        %v1266 = vunpack.c.l.b16 %v1202
        %v1267 = vpack.c.b16 %v1236, %v1235
        %v1268 = vpack.c.b16 %v1238, %v1237
        %v1269 = vpack.c.b16 %v1240, %v1239
        %v1270 = vpack.c.b16 %v1242, %v1241
        %v1271 = vpack.c.b16 %v1244, %v1243
        %v1272 = vpack.c.b16 %v1246, %v1245
        %v1273 = vpack.c.b16 %v1248, %v1247
        %v1274 = vpack.c.b16 %v1250, %v1249
        %v1275 = vpack.c.b16 %v1252, %v1251
        %v1276 = vpack.c.b16 %v1254, %v1253
        %v1277 = vpack.c.b16 %v1256, %v1255
        %v1278 = vpack.c.b16 %v1258, %v1257
        %v1279 = vpack.c.b16 %v1260, %v1259
        %v1280 = vpack.c.b16 %v1262, %v1261
        %v1281 = vpack.c.b16 %v1264, %v1263
        %v1282 = vpack.c.b16 %v1266, %v1265
        %1299 = vmatprep.subr.bf16.mxu0 0
        %1300 = vmatpush1.bf16.msra.mxu0 %v1267
        %1301 = vmatprep.subr.bf16.mxu0 0
        %1302 = vmatpush1.bf16.msra.mxu0 %v1268
        %1303 = vmatprep.subr.bf16.mxu0 0
        %1304 = vmatpush1.bf16.msra.mxu0 %v1269
        %1305 = vmatprep.subr.bf16.mxu0 0
        %1306 = vmatpush1.bf16.msra.mxu0 %v1270
        %1307 = vmatprep.subr.bf16.mxu0 0
        %1308 = vmatpush1.bf16.msra.mxu0 %v1271
        %1309 = vmatprep.subr.bf16.mxu0 0
        %1310 = vmatpush1.bf16.msra.mxu0 %v1272
        %1311 = vmatprep.subr.bf16.mxu0 0
        %1312 = vmatpush1.bf16.msra.mxu0 %v1273
        %1313 = vmatprep.subr.bf16.mxu0 0
        %1314 = vmatpush1.bf16.msra.mxu0 %v1274
        %1315 = vmatprep.subr.bf16.mxu0 0
        %1316 = vmatpush1.bf16.msra.mxu0 %v1275
        %1317 = vmatprep.subr.bf16.mxu0 0
        %1318 = vmatpush1.bf16.msra.mxu0 %v1276
        %1319 = vmatprep.subr.bf16.mxu0 0
        %1320 = vmatpush1.bf16.msra.mxu0 %v1277
        %1321 = vmatprep.subr.bf16.mxu0 0
        %1322 = vmatpush1.bf16.msra.mxu0 %v1278
        %1323 = vmatprep.subr.bf16.mxu0 0
        %1324 = vmatpush1.bf16.msra.mxu0 %v1279
        %1325 = vmatprep.subr.bf16.mxu0 0
        %1326 = vmatpush1.bf16.msra.mxu0 %v1280
        %1327 = vmatprep.subr.bf16.mxu0 0
        %1328 = vmatpush1.bf16.msra.mxu0 %v1281
        %1329 = vmatprep.subr.bf16.mxu0 0
        %1330 = vmatpush1.bf16.msra.mxu0 %v1282
        %1331 = vmatprep.mubr.bf16.mxu0 %v1156
        %1332 = vmatmul.mubr.bf16.gmra.mrb[0].mxu0 %v1155
        %v1333 = vpop.f32.mrb[0].mxu0
        %v1334 = vadd.f32 0.0, %v1333
        %v1335 = vpop.f32.mrb[0].mxu0
        %v1336 = vpop.f32.mrb[0].mxu0
        %v1337 = vadd.f32 0.0, %v1336
        %v1338 = vpop.f32.mrb[0].mxu0
        %1339 = vmatprep.mubr.bf16.mxu0 %v1158
        %1340 = vmatmul.mubr.bf16.gmra.mrb[0].mxu0 %v1157
        %v1341 = vpop.f32.mrb[0].mxu0
        %v1342 = vadd.f32 0.0, %v1341
        %v1343 = vpop.f32.mrb[0].mxu0
        %v1344 = vpop.f32.mrb[0].mxu0
        %v1345 = vadd.f32 0.0, %v1344
        %v1346 = vpop.f32.mrb[0].mxu0
        %1347 = vmatprep.mubr.bf16.mxu0 %v1160
        %1348 = vmatmul.mubr.bf16.gmra.mrb[0].mxu0 %v1159
        %v1349 = vpop.f32.mrb[0].mxu0
        %v1350 = vadd.f32 0.0, %v1349
        %v1351 = vpop.f32.mrb[0].mxu0
        %v1352 = vpop.f32.mrb[0].mxu0
        %v1353 = vadd.f32 0.0, %v1352
        %v1354 = vpop.f32.mrb[0].mxu0
        %1355 = vmatprep.mubr.bf16.mxu0 %v1162
        %1356 = vmatmul.mubr.bf16.gmra.mrb[0].mxu0 %v1161
        %v1357 = vpop.f32.mrb[0].mxu0
        %v1358 = vadd.f32 0.0, %v1357
        %v1359 = vpop.f32.mrb[0].mxu0
        %v1360 = vpop.f32.mrb[0].mxu0
        %v1361 = vadd.f32 0.0, %v1360
        %v1362 = vpop.f32.mrb[0].mxu0
        %1363 = vmatprep.mubr.bf16.mxu0 %v1164
        %1364 = vmatmul.mubr.bf16.gmra.mrb[0].mxu0 %v1163
        %v1365 = vpop.f32.mrb[0].mxu0
        %v1366 = vadd.f32 0.0, %v1365
        %v1367 = vpop.f32.mrb[0].mxu0
        %v1368 = vpop.f32.mrb[0].mxu0
        %v1369 = vadd.f32 0.0, %v1368
        %v1370 = vpop.f32.mrb[0].mxu0
        %1371 = vmatprep.mubr.bf16.mxu0 %v1166
        %1372 = vmatmul.mubr.bf16.gmra.mrb[0].mxu0 %v1165
        %v1373 = vpop.f32.mrb[0].mxu0
        %v1374 = vadd.f32 0.0, %v1373
        %v1375 = vpop.f32.mrb[0].mxu0
        %v1376 = vpop.f32.mrb[0].mxu0
        %v1377 = vadd.f32 0.0, %v1376
        %v1378 = vpop.f32.mrb[0].mxu0
        %1379 = vmatprep.mubr.bf16.mxu0 %v1168
        %1380 = vmatmul.mubr.bf16.gmra.mrb[0].mxu0 %v1167
        %v1381 = vpop.f32.mrb[0].mxu0
        %v1382 = vadd.f32 0.0, %v1381
        %v1383 = vpop.f32.mrb[0].mxu0
        %v1384 = vpop.f32.mrb[0].mxu0
        %v1385 = vadd.f32 0.0, %v1384
        %v1386 = vpop.f32.mrb[0].mxu0
        %1387 = vmatprep.mubr.bf16.mxu0 %v1170
        %1388 = vmatmul.mubr.bf16.gmra.mrb[0].mxu0 %v1169
        %v1389 = vpop.f32.mrb[0].mxu0
        %v1390 = vadd.f32 0.0, %v1389
        %v1391 = vpop.f32.mrb[0].mxu0
        %v1392 = vpop.f32.mrb[0].mxu0
        %v1393 = vadd.f32 0.0, %v1392
        %v1394 = vpop.f32.mrb[0].mxu0
        %1395 = vdwg.mxu0
        %v1396 = vadd.f32 %v1139, %v1334
        %v1397 = vadd.f32 %v1140, %v1337
        %v1398 = vadd.f32 %v1141, %v1342
        %v1399 = vadd.f32 %v1142, %v1345
        %v1400 = vadd.f32 %v1143, %v1350
        %v1401 = vadd.f32 %v1144, %v1353
        %v1402 = vadd.f32 %v1145, %v1358
        %v1403 = vadd.f32 %v1146, %v1361
        %v1404 = vadd.f32 %v1147, %v1366
        %v1405 = vadd.f32 %v1148, %v1369
        %v1406 = vadd.f32 %v1149, %v1374
        %v1407 = vadd.f32 %v1150, %v1377
        %v1408 = vadd.f32 %v1151, %v1382
        %v1409 = vadd.f32 %v1152, %v1385
        %v1410 = vadd.f32 %v1153, %v1390
        %v1411 = vadd.f32 %v1154, %v1393
        %1412 = vst [vmem:[#allocation10] sm:$0xff] %v1396
        %1413 = vst [vmem:[#allocation10 + $0x8] sm:$0xff] %v1397
        %1414 = vst [vmem:[#allocation10 + $0x10] sm:$0xff] %v1398
        %1415 = vst [vmem:[#allocation10 + $0x18] sm:$0xff] %v1399
        %1416 = vst [vmem:[#allocation10 + $0x20] sm:$0xff] %v1400
        %1417 = vst [vmem:[#allocation10 + $0x28] sm:$0xff] %v1401
        %1418 = vst [vmem:[#allocation10 + $0x30] sm:$0xff] %v1402
        %1419 = vst [vmem:[#allocation10 + $0x38] sm:$0xff] %v1403
        %1420 = vst [vmem:[#allocation10 + $0x40] sm:$0xff] %v1404
        %1421 = vst [vmem:[#allocation10 + $0x48] sm:$0xff] %v1405
        %1422 = vst [vmem:[#allocation10 + $0x50] sm:$0xff] %v1406
        %1423 = vst [vmem:[#allocation10 + $0x58] sm:$0xff] %v1407
        %1424 = vst [vmem:[#allocation10 + $0x60] sm:$0xff] %v1408
        %1425 = vst [vmem:[#allocation10 + $0x68] sm:$0xff] %v1409
        %1426 = vst [vmem:[#allocation10 + $0x70] sm:$0xff] %v1410
        %1427 = vst [vmem:[#allocation10 + $0x78] sm:$0xff] %v1411
        // Predicated region
        $region61: #{tpu_custom_call.1} parent=39 // pred_check
          %p1428 = pneg %p179
        $region62: #{tpu_custom_call.1} parent=39 // pred_check_branch
          %1430 = sbr.rel (%p1428) target = $region64
        $region63: #{tpu_custom_call.1} parent=39 // pred_region
          %s1431 = smul.u32 16, %s28
          %s1433 = ssub.s32 2048, 2048
          %1434 = vsyncadd [#allocation4], %s1433
          %s1435 = smul.addr %s1431, 128
          %s1436 = scalar_lea.hbm %s5, %s1435
          %s1437 = sshll.u32 [#allocation10], 4
          %s1438 = int_to_ptr.vmem [resolvable:$true] %s1437
          %1443 = dma.vmem_to_hbm [thread:$0]  %s1438, 2048, %s1436, [#allocation4], 128, 128, 8
        $region64: #{tpu_custom_call.1} parent=39 // pred_fallthru
          _
        // Predicated region
        $region65: #{tpu_custom_call.1} parent=39 // pred_check
          %p1444 = pneg %p179
        $region66: #{tpu_custom_call.1} parent=39 // pred_check_branch
          %1446 = sbr.rel (%p1444) target = $region68
        $region67: #{tpu_custom_call.1} parent=39 // pred_region
          %1447 = dma.done [#allocation4], 2048
        $region68: #{tpu_custom_call.1} parent=39 // pred_fallthru
          _
      $region40: #{tpu_custom_call.1} parent=5 // pred_fallthru
        _
      %p1448 = scmp.le.s32.totalorder 2, %s19
      // Predicated region
      $region69: #{tpu_custom_call.1} parent=5 // pred_check
        %p1449 = pneg %p1448
      $region70: #{tpu_custom_call.1} parent=5 // pred_check_branch
        %1451 = sbr.rel (%p1449) target = $region72
      $region71: #{tpu_custom_call.1} parent=5 // pred_region
        %s1452 = ssub.s32 %s19, 2
      $region72: #{tpu_custom_call.1} parent=5 // pred_fallthru
        _
    $region6: #{tpu_custom_call.1} parent=1 // loop_footer
      %s23 = sadd.s32 1, %s19
    $region7: #{tpu_custom_call.1} parent=1 // loop_footer_branch
      %18 = sbr.rel target = $region3
    $region8: #{tpu_custom_call.1} parent=1 // loop_exit
      _
    %1453 = vsyncpa [#allocation3], 1
    %s1454 = scalar_lea.sflag [#allocation3], 1
    %1455 = vsyncpa %s1454, 1
    %1456 = vsyncpa [#allocation6], 1
    %s1457 = scalar_lea.sflag [#allocation6], 1
    %1458 = vsyncpa %s1457, 1
    %1459 = vsyncpa [#allocation9], 1
    %s1460 = scalar_lea.sflag [#allocation9], 1
    %1461 = vsyncpa %s1460, 1
    %1462 = vsyncpa [#allocation4], 1
    %s1463 = scalar_lea.sflag [#allocation4], 1
    %1464 = vsyncpa %s1463, 1

</llo_original>
